<compile_context>
chip_gen: v5e
topology: v5e:2x2
jax: 0.10.0
libtpu: 0.0.40
codegen_flags: <defaults>
</compile_context>

<pallas_src>
import functools

import jax
import jax.numpy as jnp
from jax.experimental import pallas as pl
from jax.experimental.pallas import tpu as pltpu


# ----------------------------------------------------------------------------
# Fused concat + 1x1 Conv + BatchNorm + SiLU Pallas kernel.
# ----------------------------------------------------------------------------

_PALLAS_MIN_BYTES = 2 << 20  # below ~2 MiB let XLA fuse the op (review item).


def _make_fused_kernel(num_branches):
    """Kernel over one (batch, hw-tile) block.

    refs = (x_0..x_{B-1}, w_0..w_{B-1}, scale, bias, out)
      x_i   : (1, C_i, T)   branch activations (VMEM tile)
      w_i   : (Cout, C_i)   1x1-conv weight slab for branch i
      scale : (Cout, 1)     folded BatchNorm scale
      bias  : (Cout, 1)     folded BatchNorm bias
      out   : (1, Cout, T)
    """

    def kernel(*refs):
        xs = refs[:num_branches]
        ws = refs[num_branches:2 * num_branches]
        scale_ref, bias_ref, out_ref = refs[2 * num_branches:]

        acc = jnp.dot(ws[0][...], xs[0][0],
                      preferred_element_type=jnp.float32,
                      precision=jax.lax.Precision.HIGHEST)
        for b in range(1, num_branches):
            acc = acc + jnp.dot(ws[b][...], xs[b][0],
                                preferred_element_type=jnp.float32,
                                precision=jax.lax.Precision.HIGHEST)
        y = acc * scale_ref[...] + bias_ref[...]
        sig = 1.0 / (1.0 + jnp.exp(-y))          # SiLU = y * sigmoid(y)
        out_ref[0] = (y * sig).astype(out_ref.dtype)

    return kernel


def _pick_hw_tile(hw):
    # Lane-dense tiles: multiple of 128 when possible, else the full extent.
    if hw % 128 != 0:
        return hw
    for t in (2048, 1024, 512, 256, 128):
        if hw % t == 0:
            return t
    return hw


def fused_concat_conv1x1_bn_silu(branches, w, gamma, beta, mean, var,
                                 eps=1e-5, *, force_pallas=False):
    """SiLU(BN(Conv1x1(concat(branches, axis=1)))) without materializing the concat."""
    branches = [b for b in branches if b.shape[1] > 0]   # drop degenerate C_i=0
    assert branches, "need at least one non-empty branch"
    n, _, h, w_sp = branches[0].shape
    dtype = branches[0].dtype
    cs = []
    for b in branches:
        assert b.ndim == 4 and b.shape[0] == n and b.shape[2:] == (h, w_sp)
        assert b.dtype == dtype
        cs.append(b.shape[1])
    cin = sum(cs)
    cout = w.shape[0]
    w2d = w.reshape(cout, cin)                 # (Cout, Cin, 1, 1) -> (Cout, Cin)
    hw = h * w_sp

    # Fold inference BatchNorm into per-output-channel scale / bias.
    inv_std = jax.lax.rsqrt(var.astype(jnp.float32) + eps)
    scale = (gamma * inv_std).astype(jnp.float32)
    bias = (beta - mean * gamma * inv_std).astype(jnp.float32)

    # Per-branch weight slabs of the 1x1 conv (the "fused concat").
    offs, slabs = 0, []
    for c in cs:
        slabs.append(w2d[:, offs:offs + c])
        offs += c

    itemsize = jnp.dtype(dtype).itemsize
    io_bytes = (n * cin * hw + n * cout * hw) * itemsize + cout * (cin + 2) * 4

    if not force_pallas and io_bytes < _PALLAS_MIN_BYTES:
        # Tiny tensors (the real RFB1 shapes): pallas_call fixed overhead would
        # dominate; let XLA fuse the accumulated 1x1 conv itself.
        acc = None
        for xb, wb in zip(branches, slabs):
            t = jnp.einsum("oc,nchw->nohw", wb, xb,
                           precision=jax.lax.Precision.HIGHEST)
            acc = t if acc is None else acc + t
        y = acc * scale[None, :, None, None] + bias[None, :, None, None]
        return (y * jax.nn.sigmoid(y)).astype(dtype)

    # Free minor-dim merge: (N, C_i, H, W) -> (N, C_i, H*W).
    flats = [b.reshape(n, c, hw) for b, c in zip(branches, cs)]

    tile_hw = _pick_hw_tile(hw)
    grid = (n, hw // tile_hw)

    in_specs = (
        [pl.BlockSpec((1, c, tile_hw), lambda ni, ji: (ni, 0, ji)) for c in cs]
        + [pl.BlockSpec((cout, c), lambda ni, ji: (0, 0)) for c in cs]
        + [pl.BlockSpec((cout, 1), lambda ni, ji: (0, 0)),
           pl.BlockSpec((cout, 1), lambda ni, ji: (0, 0))]
    )
    out_spec = pl.BlockSpec((1, cout, tile_hw), lambda ni, ji: (ni, 0, ji))

    cost = pl.CostEstimate(
        flops=2 * n * hw * cin * cout,
        transcendentals=n * hw * cout,
        bytes_accessed=io_bytes,
    )

    out = pl.pallas_call(
        _make_fused_kernel(len(branches)),
        out_shape=jax.ShapeDtypeStruct((n, cout, hw), dtype),
        grid=grid,
        in_specs=in_specs,
        out_specs=out_spec,
        cost_estimate=cost,
        compiler_params=pltpu.CompilerParams(
            dimension_semantics=("parallel", "parallel")),
    )(*flats, *slabs, scale.reshape(cout, 1), bias.reshape(cout, 1))

    return out.reshape(n, cout, h, w_sp)


# ----------------------------------------------------------------------------
# RFB1 branches (dense / dilated convs) in plain JAX; XLA lowers these well.
# ----------------------------------------------------------------------------

def _init_conv_bn(key, c1, c2, k):
    kw, kg, kb, km, kv = jax.random.split(key, 5)
    fan_in = float(c1 * k * k)
    w = jax.random.normal(kw, (c2, c1, k, k), jnp.float32) * (fan_in ** -0.5)
    gamma = 1.0 + 0.1 * jax.random.normal(kg, (c2,), jnp.float32)
    beta = 0.1 * jax.random.normal(kb, (c2,), jnp.float32)
    mean = 0.1 * jax.random.normal(km, (c2,), jnp.float32)
    var = 1.0 + 0.1 * jnp.abs(jax.random.normal(kv, (c2,), jnp.float32))
    return dict(w=w, gamma=gamma, beta=beta, mean=mean, var=var)


def _conv_bn_silu(p, x, *, stride=1, dilation=1, eps=1e-5):
    # Conv2d(bias=False) + BatchNorm (inference) + SiLU, matching Conv/autopad.
    k = p["w"].shape[2]
    pad = dilation * (k // 2)
    y = jax.lax.conv_general_dilated(
        x, p["w"], window_strides=(stride, stride),
        padding=[(pad, pad), (pad, pad)],
        rhs_dilation=(dilation, dilation),
        dimension_numbers=("NCHW", "OIHW", "NCHW"),
        precision=jax.lax.Precision.HIGHEST)
    scale = p["gamma"] * jax.lax.rsqrt(p["var"] + eps)
    bias = p["beta"] - p["mean"] * scale
    y = y * scale[None, :, None, None] + bias[None, :, None, None]
    return y * jax.nn.sigmoid(y)   # BN always applies here since H*W > 1


def init_rfb1_params(key, in_planes, out_planes, map_reduce=4):
    inter = in_planes // map_reduce
    layout = [
        ("b0_0", in_planes, inter, 1), ("b0_1", inter, inter, 3),
        ("b1_0", in_planes, inter, 1), ("b1_1", inter, inter, 3), ("b1_2", inter, inter, 3),
        ("b2_0", in_planes, inter, 1), ("b2_1", inter, inter, 3), ("b2_2", inter, inter, 3),
        ("b3_0", in_planes, inter, 1), ("b3_1", inter, inter, 5), ("b3_2", inter, inter, 3),
        ("fusion", 4 * inter, out_planes, 1),
    ]
    keys = jax.random.split(key, len(layout))
    return {name: _init_conv_bn(k, c1, c2, ksz)
            for k, (name, c1, c2, ksz) in zip(keys, layout)}


def _branch_outputs(params, x, d=(3, 5, 7)):
    x0 = _conv_bn_silu(params["b0_1"], _conv_bn_silu(params["b0_0"], x))
    t1 = _conv_bn_silu(params["b1_1"], _conv_bn_silu(params["b1_0"], x))
    x1 = _conv_bn_silu(params["b1_2"], t1, dilation=d[0])
    t2 = _conv_bn_silu(params["b2_1"], _conv_bn_silu(params["b2_0"], x))
    x2 = _conv_bn_silu(params["b2_2"], t2, dilation=d[1])
    t3 = _conv_bn_silu(params["b3_1"], _conv_bn_silu(params["b3_0"], x))
    x3 = _conv_bn_silu(params["b3_2"], t3, dilation=d[2])
    return [x0, x1, x2, x3]


@functools.partial(jax.jit, static_argnames=("force_pallas",))
def rfb1_forward(params, x, force_pallas=False):
    xs = _branch_outputs(params, x)
    f = params["fusion"]
    return fused_concat_conv1x1_bn_silu(
        xs, f["w"], f["gamma"], f["beta"], f["mean"], f["var"],
        force_pallas=force_pallas)


@jax.jit
def rfb1_forward_reference(params, x):
    xs = _branch_outputs(params, x)
    cat = jnp.concatenate(xs, axis=1)      # materialized concat (reference only)
    return _conv_bn_silu(params["fusion"], cat)


if __name__ == "__main__":
    key = jax.random.PRNGKey(0)
    n, in_planes, h, w = 2, 16, 16, 16
    out_planes = 32
    map_reduce = 4

    kp, kx = jax.random.split(key)
    params = init_rfb1_params(kp, in_planes, out_planes, map_reduce)
    x = jax.random.normal(kx, (n, in_planes, h, w), dtype=jnp.float32)

    # Exercise the fused Pallas kernel explicitly.
    out = rfb1_forward(params, x, force_pallas=True)
    out = jax.block_until_ready(out)

    # Pure-JAX reference: concat materialized, Fusion as a 1x1 conv.
    ref = jax.block_until_ready(rfb1_forward_reference(params, x))

    assert out.shape == (n, out_planes, h, w), out.shape
    assert out.dtype == ref.dtype
    max_err = float(jnp.max(jnp.abs(out - ref)))
    assert jnp.allclose(out, ref, rtol=1e-4, atol=1e-4), f"max |err| = {max_err}"

    # Auto-dispatch path (tiny shapes -> plain XLA fusion) must also match.
    out_auto = jax.block_until_ready(rfb1_forward(params, x, force_pallas=False))
    assert jnp.allclose(out_auto, ref, rtol=1e-4, atol=1e-4)

    print("KERNEL_OK")
</pallas_src>

<mosaic_0001>
module attributes {stable_mosaic.version = 11 : i64} {
  func.func @kernel(%arg0: i32, %arg1: i32, %arg2: memref<1x4x256xf32, #tpu.memory_space<vmem>>, %arg3: memref<1x4x256xf32, #tpu.memory_space<vmem>>, %arg4: memref<1x4x256xf32, #tpu.memory_space<vmem>>, %arg5: memref<1x4x256xf32, #tpu.memory_space<vmem>>, %arg6: memref<32x4xf32, #tpu.memory_space<vmem>>, %arg7: memref<32x4xf32, #tpu.memory_space<vmem>>, %arg8: memref<32x4xf32, #tpu.memory_space<vmem>>, %arg9: memref<32x4xf32, #tpu.memory_space<vmem>>, %arg10: memref<32x1xf32, #tpu.memory_space<vmem>>, %arg11: memref<32x1xf32, #tpu.memory_space<vmem>>, %arg12: memref<1x32x256xf32, #tpu.memory_space<vmem>>) attributes {dimension_semantics = [#tpu.dimension_semantics<parallel>, #tpu.dimension_semantics<parallel>], iteration_bounds = array<i64: 2, 1>, scalar_prefetch = 0 : i64, scratch_operands = 0 : i64, tpu.core_type = #tpu.core_type<tc>, window_params = [{transform_indices = @transform_0, window_bounds = array<i64: 1, 4, 256>}, {transform_indices = @transform_1, window_bounds = array<i64: 1, 4, 256>}, {transform_indices = @transform_2, window_bounds = array<i64: 1, 4, 256>}, {transform_indices = @transform_3, window_bounds = array<i64: 1, 4, 256>}, {pipeline_mode = #tpu.pipeline_mode<synchronous>, transform_indices = @transform_4, window_bounds = array<i64: 32, 4>}, {pipeline_mode = #tpu.pipeline_mode<synchronous>, transform_indices = @transform_5, window_bounds = array<i64: 32, 4>}, {pipeline_mode = #tpu.pipeline_mode<synchronous>, transform_indices = @transform_6, window_bounds = array<i64: 32, 4>}, {pipeline_mode = #tpu.pipeline_mode<synchronous>, transform_indices = @transform_7, window_bounds = array<i64: 32, 4>}, {pipeline_mode = #tpu.pipeline_mode<synchronous>, transform_indices = @transform_8, window_bounds = array<i64: 32, 1>}, {pipeline_mode = #tpu.pipeline_mode<synchronous>, transform_indices = @transform_9, window_bounds = array<i64: 32, 1>}, {transform_indices = @transform_10, window_bounds = array<i64: 1, 32, 256>}]} {
    %c0 = arith.constant 0 : index
    %c0_0 = arith.constant 0 : index
    %0 = vector.load %arg6[%c0, %c0_0] : memref<32x4xf32, #tpu.memory_space<vmem>>, vector<32x4xf32>
    %c0_1 = arith.constant 0 : index
    %c0_2 = arith.constant 0 : index
    %c0_3 = arith.constant 0 : index
    %1 = vector.load %arg2[%c0_1, %c0_2, %c0_3] : memref<1x4x256xf32, #tpu.memory_space<vmem>>, vector<1x4x256xf32>
    %2 = vector.shape_cast %1 : vector<1x4x256xf32> to vector<4x256xf32>
    %cst = arith.constant dense<0.000000e+00> : vector<32x256xf32>
    %3 = tpu.matmul %0, %2, %cst {dimension_numbers = #tpu.dot_dimension_numbers<[1], [0], [0], [1], [0, 0, 1, 1], [], []>, precision = #tpu.contract_precision<fp32>} : vector<32x4xf32>, vector<4x256xf32>, vector<32x256xf32> -> vector<32x256xf32>
    %c0_4 = arith.constant 0 : index
    %c0_5 = arith.constant 0 : index
    %4 = vector.load %arg7[%c0_4, %c0_5] : memref<32x4xf32, #tpu.memory_space<vmem>>, vector<32x4xf32>
    %c0_6 = arith.constant 0 : index
    %c0_7 = arith.constant 0 : index
    %c0_8 = arith.constant 0 : index
    %5 = vector.load %arg3[%c0_6, %c0_7, %c0_8] : memref<1x4x256xf32, #tpu.memory_space<vmem>>, vector<1x4x256xf32>
    %6 = vector.shape_cast %5 : vector<1x4x256xf32> to vector<4x256xf32>
    %cst_9 = arith.constant dense<0.000000e+00> : vector<32x256xf32>
    %7 = tpu.matmul %4, %6, %cst_9 {dimension_numbers = #tpu.dot_dimension_numbers<[1], [0], [0], [1], [0, 0, 1, 1], [], []>, precision = #tpu.contract_precision<fp32>} : vector<32x4xf32>, vector<4x256xf32>, vector<32x256xf32> -> vector<32x256xf32>
    %8 = arith.addf %3, %7 : vector<32x256xf32>
    %c0_10 = arith.constant 0 : index
    %c0_11 = arith.constant 0 : index
    %9 = vector.load %arg8[%c0_10, %c0_11] : memref<32x4xf32, #tpu.memory_space<vmem>>, vector<32x4xf32>
    %c0_12 = arith.constant 0 : index
    %c0_13 = arith.constant 0 : index
    %c0_14 = arith.constant 0 : index
    %10 = vector.load %arg4[%c0_12, %c0_13, %c0_14] : memref<1x4x256xf32, #tpu.memory_space<vmem>>, vector<1x4x256xf32>
    %11 = vector.shape_cast %10 : vector<1x4x256xf32> to vector<4x256xf32>
    %cst_15 = arith.constant dense<0.000000e+00> : vector<32x256xf32>
    %12 = tpu.matmul %9, %11, %cst_15 {dimension_numbers = #tpu.dot_dimension_numbers<[1], [0], [0], [1], [0, 0, 1, 1], [], []>, precision = #tpu.contract_precision<fp32>} : vector<32x4xf32>, vector<4x256xf32>, vector<32x256xf32> -> vector<32x256xf32>
    %13 = arith.addf %8, %12 : vector<32x256xf32>
    %c0_16 = arith.constant 0 : index
    %c0_17 = arith.constant 0 : index
    %14 = vector.load %arg9[%c0_16, %c0_17] : memref<32x4xf32, #tpu.memory_space<vmem>>, vector<32x4xf32>
    %c0_18 = arith.constant 0 : index
    %c0_19 = arith.constant 0 : index
    %c0_20 = arith.constant 0 : index
    %15 = vector.load %arg5[%c0_18, %c0_19, %c0_20] : memref<1x4x256xf32, #tpu.memory_space<vmem>>, vector<1x4x256xf32>
    %16 = vector.shape_cast %15 : vector<1x4x256xf32> to vector<4x256xf32>
    %cst_21 = arith.constant dense<0.000000e+00> : vector<32x256xf32>
    %17 = tpu.matmul %14, %16, %cst_21 {dimension_numbers = #tpu.dot_dimension_numbers<[1], [0], [0], [1], [0, 0, 1, 1], [], []>, precision = #tpu.contract_precision<fp32>} : vector<32x4xf32>, vector<4x256xf32>, vector<32x256xf32> -> vector<32x256xf32>
    %18 = arith.addf %13, %17 : vector<32x256xf32>
    %c0_22 = arith.constant 0 : index
    %c0_23 = arith.constant 0 : index
    %19 = vector.load %arg10[%c0_22, %c0_23] : memref<32x1xf32, #tpu.memory_space<vmem>>, vector<32x1xf32>
    %20 = vector.broadcast %19 : vector<32x1xf32> to vector<32x256xf32>
    %21 = arith.mulf %18, %20 : vector<32x256xf32>
    %c0_24 = arith.constant 0 : index
    %c0_25 = arith.constant 0 : index
    %22 = vector.load %arg11[%c0_24, %c0_25] : memref<32x1xf32, #tpu.memory_space<vmem>>, vector<32x1xf32>
    %23 = vector.broadcast %22 : vector<32x1xf32> to vector<32x256xf32>
    %24 = arith.addf %21, %23 : vector<32x256xf32>
    %cst_26 = arith.constant 0.000000e+00 : f32
    %25 = vector.broadcast %cst_26 : f32 to vector<32x256xf32>
    %26 = arith.subf %25, %24 : vector<32x256xf32>
    %27 = math.exp %26 : vector<32x256xf32>
    %cst_27 = arith.constant 1.000000e+00 : f32
    %28 = vector.broadcast %cst_27 : f32 to vector<32x256xf32>
    %29 = arith.addf %28, %27 : vector<32x256xf32>
    %cst_28 = arith.constant 1.000000e+00 : f32
    %30 = vector.broadcast %cst_28 : f32 to vector<32x256xf32>
    %31 = arith.divf %30, %29 : vector<32x256xf32>
    %32 = arith.mulf %24, %31 : vector<32x256xf32>
    %c0_29 = arith.constant 0 : index
    %c0_30 = arith.constant 0 : index
    %c0_31 = arith.constant 0 : index
    %33 = vector.load %arg12[%c0_29, %c0_30, %c0_31] : memref<1x32x256xf32, #tpu.memory_space<vmem>>, vector<1x32x256xf32>
    %34 = vector.shape_cast %33 : vector<1x32x256xf32> to vector<32x256xf32>
    %35 = vector.shape_cast %32 : vector<32x256xf32> to vector<1x32x256xf32>
    tpu.vector_store %arg12[%c0_29, %c0_30, %c0_31], %35 {strides = array<i32>} : memref<1x32x256xf32, #tpu.memory_space<vmem>>, vector<1x32x256xf32>,
    return
  }
  func.func @transform_0(%arg0: i32, %arg1: i32) -> (i32, i32, i32) {
    %c0_i32 = arith.constant 0 : i32
    %c0_i32_0 = arith.constant 0 : i32
    return %arg0, %c0_i32, %arg1 : i32, i32, i32
  }
  func.func @transform_1(%arg0: i32, %arg1: i32) -> (i32, i32, i32) {
    %c0_i32 = arith.constant 0 : i32
    %c0_i32_0 = arith.constant 0 : i32
    return %arg0, %c0_i32, %arg1 : i32, i32, i32
  }
  func.func @transform_2(%arg0: i32, %arg1: i32) -> (i32, i32, i32) {
    %c0_i32 = arith.constant 0 : i32
    %c0_i32_0 = arith.constant 0 : i32
    return %arg0, %c0_i32, %arg1 : i32, i32, i32
  }
  func.func @transform_3(%arg0: i32, %arg1: i32) -> (i32, i32, i32) {
    %c0_i32 = arith.constant 0 : i32
    %c0_i32_0 = arith.constant 0 : i32
    return %arg0, %c0_i32, %arg1 : i32, i32, i32
  }
  func.func @transform_4(%arg0: i32, %arg1: i32) -> (i32, i32) {
    %c0_i32 = arith.constant 0 : i32
    %c0_i32_0 = arith.constant 0 : i32
    %c0_i32_1 = arith.constant 0 : i32
    return %c0_i32, %c0_i32_0 : i32, i32
  }
  func.func @transform_5(%arg0: i32, %arg1: i32) -> (i32, i32) {
    %c0_i32 = arith.constant 0 : i32
    %c0_i32_0 = arith.constant 0 : i32
    %c0_i32_1 = arith.constant 0 : i32
    return %c0_i32, %c0_i32_0 : i32, i32
  }
  func.func @transform_6(%arg0: i32, %arg1: i32) -> (i32, i32) {
    %c0_i32 = arith.constant 0 : i32
    %c0_i32_0 = arith.constant 0 : i32
    %c0_i32_1 = arith.constant 0 : i32
    return %c0_i32, %c0_i32_0 : i32, i32
  }
  func.func @transform_7(%arg0: i32, %arg1: i32) -> (i32, i32) {
    %c0_i32 = arith.constant 0 : i32
    %c0_i32_0 = arith.constant 0 : i32
    %c0_i32_1 = arith.constant 0 : i32
    return %c0_i32, %c0_i32_0 : i32, i32
  }
  func.func @transform_8(%arg0: i32, %arg1: i32) -> (i32, i32) {
    %c0_i32 = arith.constant 0 : i32
    %c0_i32_0 = arith.constant 0 : i32
    %c0_i32_1 = arith.constant 0 : i32
    return %c0_i32, %c0_i32_0 : i32, i32
  }
  func.func @transform_9(%arg0: i32, %arg1: i32) -> (i32, i32) {
    %c0_i32 = arith.constant 0 : i32
    %c0_i32_0 = arith.constant 0 : i32
    %c0_i32_1 = arith.constant 0 : i32
    return %c0_i32, %c0_i32_0 : i32, i32
  }
  func.func @transform_10(%arg0: i32, %arg1: i32) -> (i32, i32, i32) {
    %c0_i32 = arith.constant 0 : i32
    %c0_i32_0 = arith.constant 0 : i32
    return %arg0, %c0_i32, %arg1 : i32, i32, i32
  }
}

</mosaic_0001>

<llo_original>
// kernel: rfb1_forward.1
$region0: #{rfb1_forward.1}
  #allocation0 [shape = 'u32[]', space=smem, size = 0x4, offset = 0x4, fixed_abs, tag = 'smem constant byte address 0x4 - core index']
  #allocation1 [shape = 'u32[72,128]{1,0:T(1,128)}', space=vmem, size = 0x9000, scoped, tag = 'internal scratch']
  %s0 = inlined_call_operand.vmem [shape: f32[2,4,256], index: 0, kind: input, shape index: {}]
  %s1 = inlined_call_operand.vmem [shape: f32[2,4,256], index: 1, kind: input, shape index: {}]
  %s2 = inlined_call_operand.vmem [shape: f32[2,4,256], index: 2, kind: input, shape index: {}]
  %s3 = inlined_call_operand.vmem [shape: f32[2,4,256], index: 3, kind: input, shape index: {}]
  %s4 = inlined_call_operand.vmem [shape: f32[32,4], index: 4, kind: input, shape index: {}]
  %s5 = inlined_call_operand.vmem [shape: f32[32,4], index: 5, kind: input, shape index: {}]
  %s6 = inlined_call_operand.vmem [shape: f32[32,4], index: 6, kind: input, shape index: {}]
  %s7 = inlined_call_operand.vmem [shape: f32[32,4], index: 7, kind: input, shape index: {}]
  %s8 = inlined_call_operand.vmem [shape: f32[32,1], index: 8, kind: input, shape index: {}]
  %s9 = inlined_call_operand.vmem [shape: f32[32,1], index: 9, kind: input, shape index: {}]
  %s10 = inlined_call_operand.vmem [shape: f32[2,32,256], index: 10, kind: output, shape index: {}]
  %s11 = sld [smem:[#allocation0]]
  $region73: #{rfb1_forward.1} parent=0
    _
  %s13 = ssub.s32 1, %s11
  %s14 = scalar_select 0, %s13, %s11
  loop: start=0, step=1, limit=4
  $region2: #{rfb1_forward.1} parent=0 // loop_pre_header
    _
  $region3: #{rfb1_forward.1} parent=0 // loop_header
    %s16 = sphi 0, %s20
    %p17 = scmp.ge.s32.totalorder %s16, 4
    %s23 = sphi 0, %s35
    %s24 = sphi 0, %s31
    %s25 = sphi 0, %s23
    %s26 = sphi 0, %s24
    %s27 = sphi 0, %s25
    %s28 = sphi 0, %s26
    %s40 = sphi 0, %s42
    %s43 = sphi 0, %s40
    %s44 = sphi 0, %s43
    %s60 = sphi 0, %s44
    %s68 = sphi 0, %s70
    %s71 = sphi 0, %s68
    %s72 = sphi 0, %s71
    %s88 = sphi 0, %s72
    %s96 = sphi 0, %s98
    %s99 = sphi 0, %s96
    %s100 = sphi 0, %s99
    %s116 = sphi 0, %s100
    %s124 = sphi 0, %s126
    %s127 = sphi 0, %s124
    %s128 = sphi 0, %s127
    %s144 = sphi 0, %s128
    %s148 = sphi 0, %s148
    %s150 = sphi 0, %s148
    %s151 = sphi 0, %s150
    %s165 = sphi 0, %s151
    %s169 = sphi 0, %s169
    %s171 = sphi 0, %s169
    %s172 = sphi 0, %s171
    %s186 = sphi 0, %s172
    %s190 = sphi 0, %s190
    %s192 = sphi 0, %s190
    %s193 = sphi 0, %s192
    %s207 = sphi 0, %s193
    %s211 = sphi 0, %s211
    %s213 = sphi 0, %s211
    %s214 = sphi 0, %s213
    %s228 = sphi 0, %s214
    %s232 = sphi 0, %s232
    %s234 = sphi 0, %s232
    %s235 = sphi 0, %s234
    %s249 = sphi 0, %s235
    %s253 = sphi 0, %s253
    %s255 = sphi 0, %s253
    %s256 = sphi 0, %s255
    %s270 = sphi 0, %s256
    %s278 = sphi 0, %s280
    %s281 = sphi 0, %s278
    %s282 = sphi 0, %s281
    %s298 = sphi 0, %s282
  $region4: #{rfb1_forward.1} parent=0 // loop_header_branch
    %19 = sbr.rel (%p17) target = $region8
  $region5: #{rfb1_forward.1} parent=0 // loop_body
    %s21 = ssub.s32 %s16, 1
    %s22 = ssub.s32 %s16, 2
    %s29 = sadd.s32 1, %s24
    %p30 = scmp.ge.s32.totalorder %s29, 1
    %s31 = scalar_select %p30, 0, %s29
    %s32 = sadd.s32 1, %s23
    %s33 = scalar_select %p30, %s32, %s23
    %p34 = scmp.ge.s32.totalorder %s33, 2
    %s35 = scalar_select %p34, 0, %s33
    %s36 = ssub.s32 %s23, %s35
    %s37 = ssub.s32 %s24, %s31
    %s38 = sor.u32 %s36, %s37
    %p39 = scmp.eq.s32.totalorder %s38, 0
    %s41 = sadd.s32 %s40, 1
    %s42 = scalar_select %p39, %s40, %s41
    %p45 = pneg %p39
    %p46 = scmp.eq.s32.totalorder %s16, 1
    %p47 = por %p45, %p46
    %p48 = scmp.ne.s32.totalorder %s40, %s43
    %p49 = scmp.eq.s32.totalorder %s16, 0
    %p50 = por %p48, %p49
    %p51 = scmp.ne.s32.totalorder %s40, %s43
    %p52 = scmp.eq.s32.totalorder %s21, 1
    %p53 = por %p51, %p52
    %p54 = scmp.ne.s32.totalorder %s43, %s44
    %p55 = scmp.eq.s32.totalorder %s21, 0
    %p56 = por %p54, %p55
    %p57 = scmp.ne.s32.totalorder %s43, %s44
    %p58 = scmp.eq.s32.totalorder %s22, 1
    %p59 = por %p57, %p58
    %p61 = scmp.ne.s32.totalorder %s44, %s60
    %p62 = scmp.eq.s32.totalorder %s22, 0
    %p63 = por %p61, %p62
    %s64 = ssub.s32 %s23, %s35
    %s65 = ssub.s32 %s24, %s31
    %s66 = sor.u32 %s64, %s65
    %p67 = scmp.eq.s32.totalorder %s66, 0
    %s69 = sadd.s32 %s68, 1
    %s70 = scalar_select %p67, %s68, %s69
    %p73 = pneg %p67
    %p74 = scmp.eq.s32.totalorder %s16, 1
    %p75 = por %p73, %p74
    %p76 = scmp.ne.s32.totalorder %s68, %s71
    %p77 = scmp.eq.s32.totalorder %s16, 0
    %p78 = por %p76, %p77
    %p79 = scmp.ne.s32.totalorder %s68, %s71
    %p80 = scmp.eq.s32.totalorder %s21, 1
    %p81 = por %p79, %p80
    %p82 = scmp.ne.s32.totalorder %s71, %s72
    %p83 = scmp.eq.s32.totalorder %s21, 0
    %p84 = por %p82, %p83
    %p85 = scmp.ne.s32.totalorder %s71, %s72
    %p86 = scmp.eq.s32.totalorder %s22, 1
    %p87 = por %p85, %p86
    %p89 = scmp.ne.s32.totalorder %s72, %s88
    %p90 = scmp.eq.s32.totalorder %s22, 0
    %p91 = por %p89, %p90
    %s92 = ssub.s32 %s23, %s35
    %s93 = ssub.s32 %s24, %s31
    %s94 = sor.u32 %s92, %s93
    %p95 = scmp.eq.s32.totalorder %s94, 0
    %s97 = sadd.s32 %s96, 1
    %s98 = scalar_select %p95, %s96, %s97
    %p101 = pneg %p95
    %p102 = scmp.eq.s32.totalorder %s16, 1
    %p103 = por %p101, %p102
    %p104 = scmp.ne.s32.totalorder %s96, %s99
    %p105 = scmp.eq.s32.totalorder %s16, 0
    %p106 = por %p104, %p105
    %p107 = scmp.ne.s32.totalorder %s96, %s99
    %p108 = scmp.eq.s32.totalorder %s21, 1
    %p109 = por %p107, %p108
    %p110 = scmp.ne.s32.totalorder %s99, %s100
    %p111 = scmp.eq.s32.totalorder %s21, 0
    %p112 = por %p110, %p111
    %p113 = scmp.ne.s32.totalorder %s99, %s100
    %p114 = scmp.eq.s32.totalorder %s22, 1
    %p115 = por %p113, %p114
    %p117 = scmp.ne.s32.totalorder %s100, %s116
    %p118 = scmp.eq.s32.totalorder %s22, 0
    %p119 = por %p117, %p118
    %s120 = ssub.s32 %s23, %s35
    %s121 = ssub.s32 %s24, %s31
    %s122 = sor.u32 %s120, %s121
    %p123 = scmp.eq.s32.totalorder %s122, 0
    %s125 = sadd.s32 %s124, 1
    %s126 = scalar_select %p123, %s124, %s125
    %p129 = pneg %p123
    %p130 = scmp.eq.s32.totalorder %s16, 1
    %p131 = por %p129, %p130
    %p132 = scmp.ne.s32.totalorder %s124, %s127
    %p133 = scmp.eq.s32.totalorder %s16, 0
    %p134 = por %p132, %p133
    %p135 = scmp.ne.s32.totalorder %s124, %s127
    %p136 = scmp.eq.s32.totalorder %s21, 1
    %p137 = por %p135, %p136
    %p138 = scmp.ne.s32.totalorder %s127, %s128
    %p139 = scmp.eq.s32.totalorder %s21, 0
    %p140 = por %p138, %p139
    %p141 = scmp.ne.s32.totalorder %s127, %s128
    %p142 = scmp.eq.s32.totalorder %s22, 1
    %p143 = por %p141, %p142
    %p145 = scmp.ne.s32.totalorder %s128, %s144
    %p146 = scmp.eq.s32.totalorder %s22, 0
    %p147 = por %p145, %p146
    %s149 = sadd.s32 %s148, 1
    %p152 = scmp.eq.s32.totalorder %s16, 1
    %p153 = scmp.ne.s32.totalorder %s148, %s150
    %p154 = scmp.eq.s32.totalorder %s16, 0
    %p155 = por %p153, %p154
    %p156 = scmp.ne.s32.totalorder %s148, %s150
    %p157 = scmp.eq.s32.totalorder %s21, 1
    %p158 = por %p156, %p157
    %p159 = scmp.ne.s32.totalorder %s150, %s151
    %p160 = scmp.eq.s32.totalorder %s21, 0
    %p161 = por %p159, %p160
    %p162 = scmp.ne.s32.totalorder %s150, %s151
    %p163 = scmp.eq.s32.totalorder %s22, 1
    %p164 = por %p162, %p163
    %p166 = scmp.ne.s32.totalorder %s151, %s165
    %p167 = scmp.eq.s32.totalorder %s22, 0
    %p168 = por %p166, %p167
    %s170 = sadd.s32 %s169, 1
    %p173 = scmp.eq.s32.totalorder %s16, 1
    %p174 = scmp.ne.s32.totalorder %s169, %s171
    %p175 = scmp.eq.s32.totalorder %s16, 0
    %p176 = por %p174, %p175
    %p177 = scmp.ne.s32.totalorder %s169, %s171
    %p178 = scmp.eq.s32.totalorder %s21, 1
    %p179 = por %p177, %p178
    %p180 = scmp.ne.s32.totalorder %s171, %s172
    %p181 = scmp.eq.s32.totalorder %s21, 0
    %p182 = por %p180, %p181
    %p183 = scmp.ne.s32.totalorder %s171, %s172
    %p184 = scmp.eq.s32.totalorder %s22, 1
    %p185 = por %p183, %p184
    %p187 = scmp.ne.s32.totalorder %s172, %s186
    %p188 = scmp.eq.s32.totalorder %s22, 0
    %p189 = por %p187, %p188
    %s191 = sadd.s32 %s190, 1
    %p194 = scmp.eq.s32.totalorder %s16, 1
    %p195 = scmp.ne.s32.totalorder %s190, %s192
    %p196 = scmp.eq.s32.totalorder %s16, 0
    %p197 = por %p195, %p196
    %p198 = scmp.ne.s32.totalorder %s190, %s192
    %p199 = scmp.eq.s32.totalorder %s21, 1
    %p200 = por %p198, %p199
    %p201 = scmp.ne.s32.totalorder %s192, %s193
    %p202 = scmp.eq.s32.totalorder %s21, 0
    %p203 = por %p201, %p202
    %p204 = scmp.ne.s32.totalorder %s192, %s193
    %p205 = scmp.eq.s32.totalorder %s22, 1
    %p206 = por %p204, %p205
    %p208 = scmp.ne.s32.totalorder %s193, %s207
    %p209 = scmp.eq.s32.totalorder %s22, 0
    %p210 = por %p208, %p209
    %s212 = sadd.s32 %s211, 1
    %p215 = scmp.eq.s32.totalorder %s16, 1
    %p216 = scmp.ne.s32.totalorder %s211, %s213
    %p217 = scmp.eq.s32.totalorder %s16, 0
    %p218 = por %p216, %p217
    %p219 = scmp.ne.s32.totalorder %s211, %s213
    %p220 = scmp.eq.s32.totalorder %s21, 1
    %p221 = por %p219, %p220
    %p222 = scmp.ne.s32.totalorder %s213, %s214
    %p223 = scmp.eq.s32.totalorder %s21, 0
    %p224 = por %p222, %p223
    %p225 = scmp.ne.s32.totalorder %s213, %s214
    %p226 = scmp.eq.s32.totalorder %s22, 1
    %p227 = por %p225, %p226
    %p229 = scmp.ne.s32.totalorder %s214, %s228
    %p230 = scmp.eq.s32.totalorder %s22, 0
    %p231 = por %p229, %p230
    %s233 = sadd.s32 %s232, 1
    %p236 = scmp.eq.s32.totalorder %s16, 1
    %p237 = scmp.ne.s32.totalorder %s232, %s234
    %p238 = scmp.eq.s32.totalorder %s16, 0
    %p239 = por %p237, %p238
    %p240 = scmp.ne.s32.totalorder %s232, %s234
    %p241 = scmp.eq.s32.totalorder %s21, 1
    %p242 = por %p240, %p241
    %p243 = scmp.ne.s32.totalorder %s234, %s235
    %p244 = scmp.eq.s32.totalorder %s21, 0
    %p245 = por %p243, %p244
    %p246 = scmp.ne.s32.totalorder %s234, %s235
    %p247 = scmp.eq.s32.totalorder %s22, 1
    %p248 = por %p246, %p247
    %p250 = scmp.ne.s32.totalorder %s235, %s249
    %p251 = scmp.eq.s32.totalorder %s22, 0
    %p252 = por %p250, %p251
    %s254 = sadd.s32 %s253, 1
    %p257 = scmp.eq.s32.totalorder %s16, 1
    %p258 = scmp.ne.s32.totalorder %s253, %s255
    %p259 = scmp.eq.s32.totalorder %s16, 0
    %p260 = por %p258, %p259
    %p261 = scmp.ne.s32.totalorder %s253, %s255
    %p262 = scmp.eq.s32.totalorder %s21, 1
    %p263 = por %p261, %p262
    %p264 = scmp.ne.s32.totalorder %s255, %s256
    %p265 = scmp.eq.s32.totalorder %s21, 0
    %p266 = por %p264, %p265
    %p267 = scmp.ne.s32.totalorder %s255, %s256
    %p268 = scmp.eq.s32.totalorder %s22, 1
    %p269 = por %p267, %p268
    %p271 = scmp.ne.s32.totalorder %s256, %s270
    %p272 = scmp.eq.s32.totalorder %s22, 0
    %p273 = por %p271, %p272
    %s274 = ssub.s32 %s23, %s35
    %s275 = ssub.s32 %s24, %s31
    %s276 = sor.u32 %s274, %s275
    %p277 = scmp.eq.s32.totalorder %s276, 0
    %s279 = sadd.s32 %s278, 1
    %s280 = scalar_select %p277, %s278, %s279
    %p283 = pneg %p277
    %p284 = scmp.eq.s32.totalorder %s16, 1
    %p285 = por %p283, %p284
    %p286 = scmp.ne.s32.totalorder %s278, %s281
    %p287 = scmp.eq.s32.totalorder %s16, 0
    %p288 = por %p286, %p287
    %p289 = scmp.ne.s32.totalorder %s278, %s281
    %p290 = scmp.eq.s32.totalorder %s21, 1
    %p291 = por %p289, %p290
    %p292 = scmp.ne.s32.totalorder %s281, %s282
    %p293 = scmp.eq.s32.totalorder %s21, 0
    %p294 = por %p292, %p293
    %p295 = scmp.ne.s32.totalorder %s281, %s282
    %p296 = scmp.eq.s32.totalorder %s22, 1
    %p297 = por %p295, %p296
    %p299 = scmp.ne.s32.totalorder %s282, %s298
    %p300 = scmp.eq.s32.totalorder %s22, 0
    %p301 = por %p299, %p300
    %p302 = scmp.le.s32.totalorder 1, %s16
    %p303 = scmp.lt.s32.totalorder %s16, 3
    %p304 = pnand %p302, %p303
    %p305 = pneg %p304
    // Predicated region
    $region9: #{rfb1_forward.1} parent=5 // pred_check
      _
    $region10: #{rfb1_forward.1} parent=5 // pred_check_branch
      %307 = sbr.rel (%p304) target = $region12
    $region11: #{rfb1_forward.1} parent=5 // pred_region
      %s308 = ssub.s32 %s16, 1
      // Predicated region
      $region13: #{rfb1_forward.1} parent=11 // pred_check
        %p309 = pneg %p161
      $region14: #{rfb1_forward.1} parent=11 // pred_check_branch
        %311 = sbr.rel (%p309) target = $region16
      $region15: #{rfb1_forward.1} parent=11 // pred_region
        _
      $region16: #{rfb1_forward.1} parent=11 // pred_fallthru
        _
      // Predicated region
      $region17: #{rfb1_forward.1} parent=11 // pred_check
        %p312 = pneg %p182
      $region18: #{rfb1_forward.1} parent=11 // pred_check_branch
        %314 = sbr.rel (%p312) target = $region20
      $region19: #{rfb1_forward.1} parent=11 // pred_region
        _
      $region20: #{rfb1_forward.1} parent=11 // pred_fallthru
        _
      // Predicated region
      $region21: #{rfb1_forward.1} parent=11 // pred_check
        %p315 = pneg %p203
      $region22: #{rfb1_forward.1} parent=11 // pred_check_branch
        %317 = sbr.rel (%p315) target = $region24
      $region23: #{rfb1_forward.1} parent=11 // pred_region
        _
      $region24: #{rfb1_forward.1} parent=11 // pred_fallthru
        _
      // Predicated region
      $region25: #{rfb1_forward.1} parent=11 // pred_check
        %p318 = pneg %p224
      $region26: #{rfb1_forward.1} parent=11 // pred_check_branch
        %320 = sbr.rel (%p318) target = $region28
      $region27: #{rfb1_forward.1} parent=11 // pred_region
        _
      $region28: #{rfb1_forward.1} parent=11 // pred_fallthru
        _
      // Predicated region
      $region29: #{rfb1_forward.1} parent=11 // pred_check
        %p321 = pneg %p245
      $region30: #{rfb1_forward.1} parent=11 // pred_check_branch
        %323 = sbr.rel (%p321) target = $region32
      $region31: #{rfb1_forward.1} parent=11 // pred_region
        _
      $region32: #{rfb1_forward.1} parent=11 // pred_fallthru
        _
      // Predicated region
      $region33: #{rfb1_forward.1} parent=11 // pred_check
        %p324 = pneg %p266
      $region34: #{rfb1_forward.1} parent=11 // pred_check_branch
        %326 = sbr.rel (%p324) target = $region36
      $region35: #{rfb1_forward.1} parent=11 // pred_region
        _
      $region36: #{rfb1_forward.1} parent=11 // pred_fallthru
        _
    $region12: #{rfb1_forward.1} parent=5 // pred_fallthru
      _
    %p327 = scmp.lt.s32.totalorder %s16, 2
    // Predicated region
    $region37: #{rfb1_forward.1} parent=5 // pred_check
      %p328 = pneg %p327
    $region38: #{rfb1_forward.1} parent=5 // pred_check_branch
      %330 = sbr.rel (%p328) target = $region40
    $region39: #{rfb1_forward.1} parent=5 // pred_region
      // Predicated region
      $region41: #{rfb1_forward.1} parent=39 // pred_check
        %p331 = pneg %p50
      $region42: #{rfb1_forward.1} parent=39 // pred_check_branch
        %333 = sbr.rel (%p331) target = $region44
      $region43: #{rfb1_forward.1} parent=39 // pred_region
        %s334 = smul.u32 2, %s24
        %p335 = scmp.lt.s32.totalorder %s23, 1
        %s336 = scalar_select %p335, %s23, 1
        %p337 = scmp.lt.s32.totalorder %s334, 1
        %s338 = scalar_select %p337, %s334, 1
        %s339 = smul.addr %s336, 2
        %s340 = sadd.s32 %s338, %s339
        %s341 = smul.addr %s340, 4
        %s342 = scalar_lea.vmem %s0, %s341
        %s343 = smul.u32 2, %s24
      $region44: #{rfb1_forward.1} parent=39 // pred_fallthru
        _
      // Predicated region
      $region45: #{rfb1_forward.1} parent=39 // pred_check
        %p344 = pneg %p78
      $region46: #{rfb1_forward.1} parent=39 // pred_check_branch
        %346 = sbr.rel (%p344) target = $region48
      $region47: #{rfb1_forward.1} parent=39 // pred_region
        %s347 = smul.u32 2, %s24
        %p348 = scmp.lt.s32.totalorder %s23, 1
        %s349 = scalar_select %p348, %s23, 1
        %p350 = scmp.lt.s32.totalorder %s347, 1
        %s351 = scalar_select %p350, %s347, 1
        %s352 = smul.addr %s349, 2
        %s353 = sadd.s32 %s351, %s352
        %s354 = smul.addr %s353, 4
        %s355 = scalar_lea.vmem %s1, %s354
        %s356 = smul.u32 2, %s24
      $region48: #{rfb1_forward.1} parent=39 // pred_fallthru
        _
      // Predicated region
      $region49: #{rfb1_forward.1} parent=39 // pred_check
        %p357 = pneg %p106
      $region50: #{rfb1_forward.1} parent=39 // pred_check_branch
        %359 = sbr.rel (%p357) target = $region52
      $region51: #{rfb1_forward.1} parent=39 // pred_region
        %s360 = smul.u32 2, %s24
        %p361 = scmp.lt.s32.totalorder %s23, 1
        %s362 = scalar_select %p361, %s23, 1
        %p363 = scmp.lt.s32.totalorder %s360, 1
        %s364 = scalar_select %p363, %s360, 1
        %s365 = smul.addr %s362, 2
        %s366 = sadd.s32 %s364, %s365
        %s367 = smul.addr %s366, 4
        %s368 = scalar_lea.vmem %s2, %s367
        %s369 = smul.u32 2, %s24
      $region52: #{rfb1_forward.1} parent=39 // pred_fallthru
        _
      // Predicated region
      $region53: #{rfb1_forward.1} parent=39 // pred_check
        %p370 = pneg %p134
      $region54: #{rfb1_forward.1} parent=39 // pred_check_branch
        %372 = sbr.rel (%p370) target = $region56
      $region55: #{rfb1_forward.1} parent=39 // pred_region
        %s373 = smul.u32 2, %s24
        %p374 = scmp.lt.s32.totalorder %s23, 1
        %s375 = scalar_select %p374, %s23, 1
        %p376 = scmp.lt.s32.totalorder %s373, 1
        %s377 = scalar_select %p376, %s373, 1
        %s378 = smul.addr %s375, 2
        %s379 = sadd.s32 %s377, %s378
        %s380 = smul.addr %s379, 4
        %s381 = scalar_lea.vmem %s3, %s380
        %s382 = smul.u32 2, %s24
      $region56: #{rfb1_forward.1} parent=39 // pred_fallthru
        _
    $region40: #{rfb1_forward.1} parent=5 // pred_fallthru
      _
    %p383 = scmp.le.s32.totalorder 1, %s16
    %p384 = scmp.lt.s32.totalorder %s16, 3
    %p385 = pnand %p383, %p384
    %p386 = pneg %p385
    // Predicated region
    $region57: #{rfb1_forward.1} parent=5 // pred_check
      _
    $region58: #{rfb1_forward.1} parent=5 // pred_check_branch
      %388 = sbr.rel (%p385) target = $region60
    $region59: #{rfb1_forward.1} parent=5 // pred_region
      %s389 = ssub.s32 %s16, 1
      %s390 = smul.u32 2, %s26
      %p391 = scmp.lt.s32.totalorder %s25, 1
      %s392 = scalar_select %p391, %s25, 1
      %p393 = scmp.lt.s32.totalorder %s390, 1
      %s394 = scalar_select %p393, %s390, 1
      %s395 = smul.addr %s392, 2
      %s396 = sadd.s32 %s394, %s395
      %s397 = smul.addr %s396, 4
      %s398 = scalar_lea.vmem %s0, %s397
      %p399 = pneg %p56
      %p400 = pneg %p53
      %s401 = smul.u32 2, %s26
      %p402 = scmp.lt.s32.totalorder %s25, 1
      %s403 = scalar_select %p402, %s25, 1
      %p404 = scmp.lt.s32.totalorder %s401, 1
      %s405 = scalar_select %p404, %s401, 1
      %s406 = smul.addr %s403, 2
      %s407 = sadd.s32 %s405, %s406
      %s408 = smul.addr %s407, 4
      %s409 = scalar_lea.vmem %s1, %s408
      %p410 = pneg %p84
      %p411 = pneg %p81
      %s412 = smul.u32 2, %s26
      %p413 = scmp.lt.s32.totalorder %s25, 1
      %s414 = scalar_select %p413, %s25, 1
      %p415 = scmp.lt.s32.totalorder %s412, 1
      %s416 = scalar_select %p415, %s412, 1
      %s417 = smul.addr %s414, 2
      %s418 = sadd.s32 %s416, %s417
      %s419 = smul.addr %s418, 4
      %s420 = scalar_lea.vmem %s2, %s419
      %p421 = pneg %p112
      %p422 = pneg %p109
      %s423 = smul.u32 2, %s26
      %p424 = scmp.lt.s32.totalorder %s25, 1
      %s425 = scalar_select %p424, %s25, 1
      %p426 = scmp.lt.s32.totalorder %s423, 1
      %s427 = scalar_select %p426, %s423, 1
      %s428 = smul.addr %s425, 2
      %s429 = sadd.s32 %s427, %s428
      %s430 = smul.addr %s429, 4
      %s431 = scalar_lea.vmem %s3, %s430
      %p432 = pneg %p140
      %p433 = pneg %p137
      %p434 = pneg %p161
      %p435 = pneg %p158
      %p436 = pneg %p182
      %p437 = pneg %p179
      %p438 = pneg %p203
      %p439 = pneg %p200
      %p440 = pneg %p224
      %p441 = pneg %p221
      %p442 = pneg %p245
      %p443 = pneg %p242
      %p444 = pneg %p266
      %p445 = pneg %p263
      %p446 = pneg %p294
      %p447 = pneg %p291
      %s448 = smul.u32 2, %s26
      %p449 = scmp.lt.s32.totalorder %s25, 1
      %s450 = scalar_select %p449, %s25, 1
      %p451 = scmp.lt.s32.totalorder %s448, 1
      %s452 = scalar_select %p451, %s448, 1
      %s453 = smul.addr %s450, 8
      %s454 = sadd.s32 %s452, %s453
      %s455 = smul.addr %s454, 8
      %s456 = scalar_lea.vmem %s10, %s455
      %s457 = smul.u32 2, %s26
      %p458 = scmp.lt.s32.totalorder %s25, 1
      %s459 = scalar_select %p458, %s25, 1
      %p460 = scmp.lt.s32.totalorder %s457, 1
      %s461 = scalar_select %p460, %s457, 1
      %s462 = smul.addr %s459, 2
      %s463 = sadd.s32 %s461, %s462
      %s464 = smul.addr %s463, 4
      %s465 = scalar_lea.vmem %s0, %s464
      %s466 = smul.u32 2, %s26
      %s467 = smul.u32 2, %s26
      %p468 = scmp.lt.s32.totalorder %s25, 1
      %s469 = scalar_select %p468, %s25, 1
      %p470 = scmp.lt.s32.totalorder %s467, 1
      %s471 = scalar_select %p470, %s467, 1
      %s472 = smul.addr %s469, 2
      %s473 = sadd.s32 %s471, %s472
      %s474 = smul.addr %s473, 4
      %s475 = scalar_lea.vmem %s1, %s474
      %s476 = smul.u32 2, %s26
      %s477 = smul.u32 2, %s26
      %p478 = scmp.lt.s32.totalorder %s25, 1
      %s479 = scalar_select %p478, %s25, 1
      %p480 = scmp.lt.s32.totalorder %s477, 1
      %s481 = scalar_select %p480, %s477, 1
      %s482 = smul.addr %s479, 2
      %s483 = sadd.s32 %s481, %s482
      %s484 = smul.addr %s483, 4
      %s485 = scalar_lea.vmem %s2, %s484
      %s486 = smul.u32 2, %s26
      %s487 = smul.u32 2, %s26
      %p488 = scmp.lt.s32.totalorder %s25, 1
      %s489 = scalar_select %p488, %s25, 1
      %p490 = scmp.lt.s32.totalorder %s487, 1
      %s491 = scalar_select %p490, %s487, 1
      %s492 = smul.addr %s489, 2
      %s493 = sadd.s32 %s491, %s492
      %s494 = smul.addr %s493, 4
      %s495 = scalar_lea.vmem %s3, %s494
      %s496 = smul.u32 2, %s26
      %s497 = smul.u32 2, %s26
      %p498 = scmp.lt.s32.totalorder %s25, 1
      %s499 = scalar_select %p498, %s25, 1
      %p500 = scmp.lt.s32.totalorder %s497, 1
      %s501 = scalar_select %p500, %s497, 1
      %s502 = smul.addr %s499, 8
      %s503 = sadd.s32 %s501, %s502
      %s504 = smul.addr %s503, 8
      %s505 = scalar_lea.vmem %s10, %s504
      %s506 = smul.u32 2, %s26
      %v507 = vld [vmem:[%s4] sm:$0xff]
      %v508 = vld [vmem:[%s4 + $0x8] sm:$0xff]
      %v509 = vld [vmem:[%s4 + $0x10] sm:$0xff]
      %v510 = vld [vmem:[%s4 + $0x18] sm:$0xff]
      %v511 = vld [vmem:[%s465] sm:$0xff]
      %v512 = vld [vmem:[%s5] sm:$0xff]
      %v513 = vld [vmem:[%s5 + $0x8] sm:$0xff]
      %v514 = vld [vmem:[%s5 + $0x10] sm:$0xff]
      %v515 = vld [vmem:[%s5 + $0x18] sm:$0xff]
      %v516 = vld [vmem:[%s475] sm:$0xff]
      %518 = vst [vmem:[#allocation1] ss:$2 sm:$0xff] %v516
      %v519 = vld.sshfl [vmem:[#allocation1] sm:$0xff pattern:$0x75316420]
      %v520 = vld.sshfl [vmem:[#allocation1 + $0x8] sm:$0xff pattern:$0x75316420]
      %vm521 = vcmask 31744
      %v523 = vsel %vm521, %v512, 0
      %v526 = vsel %vm521, %v513, 0
      %v529 = vsel %vm521, %v514, 0
      %v532 = vsel %vm521, %v515, 0
      %vm534 = vcmask 1043456
      %v535 = vsel %vm534, %v519, 0
      %v537 = vsel %vm534, %v520, 0
      %539 = vmatpush.msra.mxu0 0.0
      %540 = vmatpush.msra.mxu0 0.0
      %541 = vmatpush.msra.mxu0 0.0
      %542 = vmatpush.msra.mxu0 0.0
      %543 = vmatpush.msra.mxu0 0.0
      %544 = vmatpush.msra.mxu0 0.0
      %545 = vmatpush.msra.mxu0 0.0
      %546 = vmatpush.msra.mxu0 0.0
      %547 = vmatpush.msra.mxu0 0.0
      %548 = vmatpush.msra.mxu0 0.0
      %549 = vmatpush.msra.mxu0 0.0
      %550 = vmatpush.msra.mxu0 0.0
      %551 = vmatpush.msra.mxu0 0.0
      %552 = vmatpush.msra.mxu0 0.0
      %553 = vmatpush.msra.mxu0 0.0
      %v554 = vand.u32 %v535, 4294901760
      %555 = vmatpush.msra.mxu0 %v554
      %v556 = vand.u32 %v523, 4294901760
      %v557 = vsub.f32 %v523, %v556
      %v558 = vand.u32 %v557, 4294901760
      %v559 = vsub.f32 %v557, %v558
      %v560 = vand.u32 %v559, 4294901760
      %561 = vmatmul.f32.gmra.mxu0 %v560
      %v562 = vpop.f32.mrf.mxu0
      %v563 = vadd.f32 0.0, %v562
      %v564 = vand.u32 %v526, 4294901760
      %v565 = vsub.f32 %v526, %v564
      %v566 = vand.u32 %v565, 4294901760
      %v567 = vsub.f32 %v565, %v566
      %v568 = vand.u32 %v567, 4294901760
      %569 = vmatmul.f32.gmra.mxu0 %v568
      %v570 = vpop.f32.mrf.mxu0
      %v571 = vadd.f32 0.0, %v570
      %v572 = vand.u32 %v529, 4294901760
      %v573 = vsub.f32 %v529, %v572
      %v574 = vand.u32 %v573, 4294901760
      %v575 = vsub.f32 %v573, %v574
      %v576 = vand.u32 %v575, 4294901760
      %577 = vmatmul.f32.gmra.mxu0 %v576
      %v578 = vpop.f32.mrf.mxu0
      %v579 = vadd.f32 0.0, %v578
      %v580 = vand.u32 %v532, 4294901760
      %v581 = vsub.f32 %v532, %v580
      %v582 = vand.u32 %v581, 4294901760
      %v583 = vsub.f32 %v581, %v582
      %v584 = vand.u32 %v583, 4294901760
      %585 = vmatmul.f32.gmra.mxu0 %v584
      %v586 = vpop.f32.mrf.mxu0
      %v587 = vadd.f32 0.0, %v586
      %588 = vdwg.mxu0
      %589 = vmatpush.msra.mxu0 0.0
      %590 = vmatpush.msra.mxu0 0.0
      %591 = vmatpush.msra.mxu0 0.0
      %592 = vmatpush.msra.mxu0 0.0
      %593 = vmatpush.msra.mxu0 0.0
      %594 = vmatpush.msra.mxu0 0.0
      %595 = vmatpush.msra.mxu0 0.0
      %596 = vmatpush.msra.mxu0 0.0
      %597 = vmatpush.msra.mxu0 0.0
      %598 = vmatpush.msra.mxu0 0.0
      %599 = vmatpush.msra.mxu0 0.0
      %600 = vmatpush.msra.mxu0 0.0
      %601 = vmatpush.msra.mxu0 0.0
      %602 = vmatpush.msra.mxu0 0.0
      %603 = vmatpush.msra.mxu0 0.0
      %v604 = vand.u32 %v535, 4294901760
      %v605 = vsub.f32 %v535, %v604
      %v606 = vand.u32 %v605, 4294901760
      %v607 = vsub.f32 %v605, %v606
      %v608 = vand.u32 %v607, 4294901760
      %609 = vmatpush.msra.mxu0 %v608
      %v610 = vand.u32 %v523, 4294901760
      %611 = vmatmul.f32.gmra.mxu0 %v610
      %v612 = vpop.f32.mrf.mxu0
      %v613 = vadd.f32 %v563, %v612
      %v614 = vand.u32 %v526, 4294901760
      %615 = vmatmul.f32.gmra.mxu0 %v614
      %v616 = vpop.f32.mrf.mxu0
      %v617 = vadd.f32 %v571, %v616
      %v618 = vand.u32 %v529, 4294901760
      %619 = vmatmul.f32.gmra.mxu0 %v618
      %v620 = vpop.f32.mrf.mxu0
      %v621 = vadd.f32 %v579, %v620
      %v622 = vand.u32 %v532, 4294901760
      %623 = vmatmul.f32.gmra.mxu0 %v622
      %v624 = vpop.f32.mrf.mxu0
      %v625 = vadd.f32 %v587, %v624
      %626 = vdwg.mxu0
      %627 = vmatpush.msra.mxu0 0.0
      %628 = vmatpush.msra.mxu0 0.0
      %629 = vmatpush.msra.mxu0 0.0
      %630 = vmatpush.msra.mxu0 0.0
      %631 = vmatpush.msra.mxu0 0.0
      %632 = vmatpush.msra.mxu0 0.0
      %633 = vmatpush.msra.mxu0 0.0
      %634 = vmatpush.msra.mxu0 0.0
      %635 = vmatpush.msra.mxu0 0.0
      %636 = vmatpush.msra.mxu0 0.0
      %637 = vmatpush.msra.mxu0 0.0
      %638 = vmatpush.msra.mxu0 0.0
      %639 = vmatpush.msra.mxu0 0.0
      %640 = vmatpush.msra.mxu0 0.0
      %641 = vmatpush.msra.mxu0 0.0
      %v642 = vand.u32 %v535, 4294901760
      %v643 = vsub.f32 %v535, %v642
      %644 = vmatpush.msra.mxu0 %v643
      %v645 = vand.u32 %v523, 4294901760
      %v646 = vsub.f32 %v523, %v645
      %647 = vmatmul.f32.gmra.mxu0 %v646
      %v648 = vpop.f32.mrf.mxu0
      %v649 = vadd.f32 %v613, %v648
      %v650 = vand.u32 %v526, 4294901760
      %v651 = vsub.f32 %v526, %v650
      %652 = vmatmul.f32.gmra.mxu0 %v651
      %v653 = vpop.f32.mrf.mxu0
      %v654 = vadd.f32 %v617, %v653
      %v655 = vand.u32 %v529, 4294901760
      %v656 = vsub.f32 %v529, %v655
      %657 = vmatmul.f32.gmra.mxu0 %v656
      %v658 = vpop.f32.mrf.mxu0
      %v659 = vadd.f32 %v621, %v658
      %v660 = vand.u32 %v532, 4294901760
      %v661 = vsub.f32 %v532, %v660
      %662 = vmatmul.f32.gmra.mxu0 %v661
      %v663 = vpop.f32.mrf.mxu0
      %v664 = vadd.f32 %v625, %v663
      %665 = vdwg.mxu0
      %666 = vmatpush.msra.mxu0 0.0
      %667 = vmatpush.msra.mxu0 0.0
      %668 = vmatpush.msra.mxu0 0.0
      %669 = vmatpush.msra.mxu0 0.0
      %670 = vmatpush.msra.mxu0 0.0
      %671 = vmatpush.msra.mxu0 0.0
      %672 = vmatpush.msra.mxu0 0.0
      %673 = vmatpush.msra.mxu0 0.0
      %674 = vmatpush.msra.mxu0 0.0
      %675 = vmatpush.msra.mxu0 0.0
      %676 = vmatpush.msra.mxu0 0.0
      %677 = vmatpush.msra.mxu0 0.0
      %678 = vmatpush.msra.mxu0 0.0
      %679 = vmatpush.msra.mxu0 0.0
      %680 = vmatpush.msra.mxu0 0.0
      %v681 = vand.u32 %v535, 4294901760
      %682 = vmatpush.msra.mxu0 %v681
      %v683 = vand.u32 %v523, 4294901760
      %v684 = vsub.f32 %v523, %v683
      %v685 = vand.u32 %v684, 4294901760
      %686 = vmatmul.f32.gmra.mxu0 %v685
      %v687 = vpop.f32.mrf.mxu0
      %v688 = vadd.f32 %v649, %v687
      %v689 = vand.u32 %v526, 4294901760
      %v690 = vsub.f32 %v526, %v689
      %v691 = vand.u32 %v690, 4294901760
      %692 = vmatmul.f32.gmra.mxu0 %v691
      %v693 = vpop.f32.mrf.mxu0
      %v694 = vadd.f32 %v654, %v693
      %v695 = vand.u32 %v529, 4294901760
      %v696 = vsub.f32 %v529, %v695
      %v697 = vand.u32 %v696, 4294901760
      %698 = vmatmul.f32.gmra.mxu0 %v697
      %v699 = vpop.f32.mrf.mxu0
      %v700 = vadd.f32 %v659, %v699
      %v701 = vand.u32 %v532, 4294901760
      %v702 = vsub.f32 %v532, %v701
      %v703 = vand.u32 %v702, 4294901760
      %704 = vmatmul.f32.gmra.mxu0 %v703
      %v705 = vpop.f32.mrf.mxu0
      %v706 = vadd.f32 %v664, %v705
      %707 = vdwg.mxu0
      %708 = vmatpush.msra.mxu0 0.0
      %709 = vmatpush.msra.mxu0 0.0
      %710 = vmatpush.msra.mxu0 0.0
      %711 = vmatpush.msra.mxu0 0.0
      %712 = vmatpush.msra.mxu0 0.0
      %713 = vmatpush.msra.mxu0 0.0
      %714 = vmatpush.msra.mxu0 0.0
      %715 = vmatpush.msra.mxu0 0.0
      %716 = vmatpush.msra.mxu0 0.0
      %717 = vmatpush.msra.mxu0 0.0
      %718 = vmatpush.msra.mxu0 0.0
      %719 = vmatpush.msra.mxu0 0.0
      %720 = vmatpush.msra.mxu0 0.0
      %721 = vmatpush.msra.mxu0 0.0
      %722 = vmatpush.msra.mxu0 0.0
      %v723 = vand.u32 %v535, 4294901760
      %v724 = vsub.f32 %v535, %v723
      %v725 = vand.u32 %v724, 4294901760
      %726 = vmatpush.msra.mxu0 %v725
      %v727 = vand.u32 %v523, 4294901760
      %728 = vmatmul.f32.gmra.mxu0 %v727
      %v729 = vpop.f32.mrf.mxu0
      %v730 = vadd.f32 %v688, %v729
      %v731 = vand.u32 %v526, 4294901760
      %732 = vmatmul.f32.gmra.mxu0 %v731
      %v733 = vpop.f32.mrf.mxu0
      %v734 = vadd.f32 %v694, %v733
      %v735 = vand.u32 %v529, 4294901760
      %736 = vmatmul.f32.gmra.mxu0 %v735
      %v737 = vpop.f32.mrf.mxu0
      %v738 = vadd.f32 %v700, %v737
      %v739 = vand.u32 %v532, 4294901760
      %740 = vmatmul.f32.gmra.mxu0 %v739
      %v741 = vpop.f32.mrf.mxu0
      %v742 = vadd.f32 %v706, %v741
      %743 = vdwg.mxu0
      %744 = vmatpush.msra.mxu0 0.0
      %745 = vmatpush.msra.mxu0 0.0
      %746 = vmatpush.msra.mxu0 0.0
      %747 = vmatpush.msra.mxu0 0.0
      %748 = vmatpush.msra.mxu0 0.0
      %749 = vmatpush.msra.mxu0 0.0
      %750 = vmatpush.msra.mxu0 0.0
      %751 = vmatpush.msra.mxu0 0.0
      %752 = vmatpush.msra.mxu0 0.0
      %753 = vmatpush.msra.mxu0 0.0
      %754 = vmatpush.msra.mxu0 0.0
      %755 = vmatpush.msra.mxu0 0.0
      %756 = vmatpush.msra.mxu0 0.0
      %757 = vmatpush.msra.mxu0 0.0
      %758 = vmatpush.msra.mxu0 0.0
      %v759 = vand.u32 %v535, 4294901760
      %760 = vmatpush.msra.mxu0 %v759
      %v761 = vand.u32 %v523, 4294901760
      %762 = vmatmul.f32.gmra.mxu0 %v761
      %v763 = vpop.f32.mrf.mxu0
      %v764 = vadd.f32 %v730, %v763
      %v765 = vand.u32 %v526, 4294901760
      %766 = vmatmul.f32.gmra.mxu0 %v765
      %v767 = vpop.f32.mrf.mxu0
      %v768 = vadd.f32 %v734, %v767
      %v769 = vand.u32 %v529, 4294901760
      %770 = vmatmul.f32.gmra.mxu0 %v769
      %v771 = vpop.f32.mrf.mxu0
      %v772 = vadd.f32 %v738, %v771
      %v773 = vand.u32 %v532, 4294901760
      %774 = vmatmul.f32.gmra.mxu0 %v773
      %v775 = vpop.f32.mrf.mxu0
      %v776 = vadd.f32 %v742, %v775
      %777 = vdwg.mxu0
      %778 = vmatpush.msra.mxu0 0.0
      %779 = vmatpush.msra.mxu0 0.0
      %780 = vmatpush.msra.mxu0 0.0
      %781 = vmatpush.msra.mxu0 0.0
      %782 = vmatpush.msra.mxu0 0.0
      %783 = vmatpush.msra.mxu0 0.0
      %784 = vmatpush.msra.mxu0 0.0
      %785 = vmatpush.msra.mxu0 0.0
      %786 = vmatpush.msra.mxu0 0.0
      %787 = vmatpush.msra.mxu0 0.0
      %788 = vmatpush.msra.mxu0 0.0
      %789 = vmatpush.msra.mxu0 0.0
      %790 = vmatpush.msra.mxu0 0.0
      %791 = vmatpush.msra.mxu0 0.0
      %792 = vmatpush.msra.mxu0 0.0
      %v793 = vand.u32 %v537, 4294901760
      %794 = vmatpush.msra.mxu0 %v793
      %v795 = vand.u32 %v523, 4294901760
      %v796 = vsub.f32 %v523, %v795
      %v797 = vand.u32 %v796, 4294901760
      %v798 = vsub.f32 %v796, %v797
      %v799 = vand.u32 %v798, 4294901760
      %800 = vmatmul.f32.gmra.mxu0 %v799
      %v801 = vpop.f32.mrf.mxu0
      %v802 = vadd.f32 0.0, %v801
      %v803 = vand.u32 %v526, 4294901760
      %v804 = vsub.f32 %v526, %v803
      %v805 = vand.u32 %v804, 4294901760
      %v806 = vsub.f32 %v804, %v805
      %v807 = vand.u32 %v806, 4294901760
      %808 = vmatmul.f32.gmra.mxu0 %v807
      %v809 = vpop.f32.mrf.mxu0
      %v810 = vadd.f32 0.0, %v809
      %v811 = vand.u32 %v529, 4294901760
      %v812 = vsub.f32 %v529, %v811
      %v813 = vand.u32 %v812, 4294901760
      %v814 = vsub.f32 %v812, %v813
      %v815 = vand.u32 %v814, 4294901760
      %816 = vmatmul.f32.gmra.mxu0 %v815
      %v817 = vpop.f32.mrf.mxu0
      %v818 = vadd.f32 0.0, %v817
      %v819 = vand.u32 %v532, 4294901760
      %v820 = vsub.f32 %v532, %v819
      %v821 = vand.u32 %v820, 4294901760
      %v822 = vsub.f32 %v820, %v821
      %v823 = vand.u32 %v822, 4294901760
      %824 = vmatmul.f32.gmra.mxu0 %v823
      %v825 = vpop.f32.mrf.mxu0
      %v826 = vadd.f32 0.0, %v825
      %827 = vdwg.mxu0
      %828 = vmatpush.msra.mxu0 0.0
      %829 = vmatpush.msra.mxu0 0.0
      %830 = vmatpush.msra.mxu0 0.0
      %831 = vmatpush.msra.mxu0 0.0
      %832 = vmatpush.msra.mxu0 0.0
      %833 = vmatpush.msra.mxu0 0.0
      %834 = vmatpush.msra.mxu0 0.0
      %835 = vmatpush.msra.mxu0 0.0
      %836 = vmatpush.msra.mxu0 0.0
      %837 = vmatpush.msra.mxu0 0.0
      %838 = vmatpush.msra.mxu0 0.0
      %839 = vmatpush.msra.mxu0 0.0
      %840 = vmatpush.msra.mxu0 0.0
      %841 = vmatpush.msra.mxu0 0.0
      %842 = vmatpush.msra.mxu0 0.0
      %v843 = vand.u32 %v537, 4294901760
      %v844 = vsub.f32 %v537, %v843
      %v845 = vand.u32 %v844, 4294901760
      %v846 = vsub.f32 %v844, %v845
      %v847 = vand.u32 %v846, 4294901760
      %848 = vmatpush.msra.mxu0 %v847
      %v849 = vand.u32 %v523, 4294901760
      %850 = vmatmul.f32.gmra.mxu0 %v849
      %v851 = vpop.f32.mrf.mxu0
      %v852 = vadd.f32 %v802, %v851
      %v853 = vand.u32 %v526, 4294901760
      %854 = vmatmul.f32.gmra.mxu0 %v853
      %v855 = vpop.f32.mrf.mxu0
      %v856 = vadd.f32 %v810, %v855
      %v857 = vand.u32 %v529, 4294901760
      %858 = vmatmul.f32.gmra.mxu0 %v857
      %v859 = vpop.f32.mrf.mxu0
      %v860 = vadd.f32 %v818, %v859
      %v861 = vand.u32 %v532, 4294901760
      %862 = vmatmul.f32.gmra.mxu0 %v861
      %v863 = vpop.f32.mrf.mxu0
      %v864 = vadd.f32 %v826, %v863
      %865 = vdwg.mxu0
      %866 = vmatpush.msra.mxu0 0.0
      %867 = vmatpush.msra.mxu0 0.0
      %868 = vmatpush.msra.mxu0 0.0
      %869 = vmatpush.msra.mxu0 0.0
      %870 = vmatpush.msra.mxu0 0.0
      %871 = vmatpush.msra.mxu0 0.0
      %872 = vmatpush.msra.mxu0 0.0
      %873 = vmatpush.msra.mxu0 0.0
      %874 = vmatpush.msra.mxu0 0.0
      %875 = vmatpush.msra.mxu0 0.0
      %876 = vmatpush.msra.mxu0 0.0
      %877 = vmatpush.msra.mxu0 0.0
      %878 = vmatpush.msra.mxu0 0.0
      %879 = vmatpush.msra.mxu0 0.0
      %880 = vmatpush.msra.mxu0 0.0
      %v881 = vand.u32 %v537, 4294901760
      %v882 = vsub.f32 %v537, %v881
      %883 = vmatpush.msra.mxu0 %v882
      %v884 = vand.u32 %v523, 4294901760
      %v885 = vsub.f32 %v523, %v884
      %886 = vmatmul.f32.gmra.mxu0 %v885
      %v887 = vpop.f32.mrf.mxu0
      %v888 = vadd.f32 %v852, %v887
      %v889 = vand.u32 %v526, 4294901760
      %v890 = vsub.f32 %v526, %v889
      %891 = vmatmul.f32.gmra.mxu0 %v890
      %v892 = vpop.f32.mrf.mxu0
      %v893 = vadd.f32 %v856, %v892
      %v894 = vand.u32 %v529, 4294901760
      %v895 = vsub.f32 %v529, %v894
      %896 = vmatmul.f32.gmra.mxu0 %v895
      %v897 = vpop.f32.mrf.mxu0
      %v898 = vadd.f32 %v860, %v897
      %v899 = vand.u32 %v532, 4294901760
      %v900 = vsub.f32 %v532, %v899
      %901 = vmatmul.f32.gmra.mxu0 %v900
      %v902 = vpop.f32.mrf.mxu0
      %v903 = vadd.f32 %v864, %v902
      %904 = vdwg.mxu0
      %905 = vmatpush.msra.mxu0 0.0
      %906 = vmatpush.msra.mxu0 0.0
      %907 = vmatpush.msra.mxu0 0.0
      %908 = vmatpush.msra.mxu0 0.0
      %909 = vmatpush.msra.mxu0 0.0
      %910 = vmatpush.msra.mxu0 0.0
      %911 = vmatpush.msra.mxu0 0.0
      %912 = vmatpush.msra.mxu0 0.0
      %913 = vmatpush.msra.mxu0 0.0
      %914 = vmatpush.msra.mxu0 0.0
      %915 = vmatpush.msra.mxu0 0.0
      %916 = vmatpush.msra.mxu0 0.0
      %917 = vmatpush.msra.mxu0 0.0
      %918 = vmatpush.msra.mxu0 0.0
      %919 = vmatpush.msra.mxu0 0.0
      %v920 = vand.u32 %v537, 4294901760
      %921 = vmatpush.msra.mxu0 %v920
      %v922 = vand.u32 %v523, 4294901760
      %v923 = vsub.f32 %v523, %v922
      %v924 = vand.u32 %v923, 4294901760
      %925 = vmatmul.f32.gmra.mxu0 %v924
      %v926 = vpop.f32.mrf.mxu0
      %v927 = vadd.f32 %v888, %v926
      %v928 = vand.u32 %v526, 4294901760
      %v929 = vsub.f32 %v526, %v928
      %v930 = vand.u32 %v929, 4294901760
      %931 = vmatmul.f32.gmra.mxu0 %v930
      %v932 = vpop.f32.mrf.mxu0
      %v933 = vadd.f32 %v893, %v932
      %v934 = vand.u32 %v529, 4294901760
      %v935 = vsub.f32 %v529, %v934
      %v936 = vand.u32 %v935, 4294901760
      %937 = vmatmul.f32.gmra.mxu0 %v936
      %v938 = vpop.f32.mrf.mxu0
      %v939 = vadd.f32 %v898, %v938
      %v940 = vand.u32 %v532, 4294901760
      %v941 = vsub.f32 %v532, %v940
      %v942 = vand.u32 %v941, 4294901760
      %943 = vmatmul.f32.gmra.mxu0 %v942
      %v944 = vpop.f32.mrf.mxu0
      %v945 = vadd.f32 %v903, %v944
      %946 = vdwg.mxu0
      %947 = vmatpush.msra.mxu0 0.0
      %948 = vmatpush.msra.mxu0 0.0
      %949 = vmatpush.msra.mxu0 0.0
      %950 = vmatpush.msra.mxu0 0.0
      %951 = vmatpush.msra.mxu0 0.0
      %952 = vmatpush.msra.mxu0 0.0
      %953 = vmatpush.msra.mxu0 0.0
      %954 = vmatpush.msra.mxu0 0.0
      %955 = vmatpush.msra.mxu0 0.0
      %956 = vmatpush.msra.mxu0 0.0
      %957 = vmatpush.msra.mxu0 0.0
      %958 = vmatpush.msra.mxu0 0.0
      %959 = vmatpush.msra.mxu0 0.0
      %960 = vmatpush.msra.mxu0 0.0
      %961 = vmatpush.msra.mxu0 0.0
      %v962 = vand.u32 %v537, 4294901760
      %v963 = vsub.f32 %v537, %v962
      %v964 = vand.u32 %v963, 4294901760
      %965 = vmatpush.msra.mxu0 %v964
      %v966 = vand.u32 %v523, 4294901760
      %967 = vmatmul.f32.gmra.mxu0 %v966
      %v968 = vpop.f32.mrf.mxu0
      %v969 = vadd.f32 %v927, %v968
      %v970 = vand.u32 %v526, 4294901760
      %971 = vmatmul.f32.gmra.mxu0 %v970
      %v972 = vpop.f32.mrf.mxu0
      %v973 = vadd.f32 %v933, %v972
      %v974 = vand.u32 %v529, 4294901760
      %975 = vmatmul.f32.gmra.mxu0 %v974
      %v976 = vpop.f32.mrf.mxu0
      %v977 = vadd.f32 %v939, %v976
      %v978 = vand.u32 %v532, 4294901760
      %979 = vmatmul.f32.gmra.mxu0 %v978
      %v980 = vpop.f32.mrf.mxu0
      %v981 = vadd.f32 %v945, %v980
      %982 = vdwg.mxu0
      %983 = vmatpush.msra.mxu0 0.0
      %984 = vmatpush.msra.mxu0 0.0
      %985 = vmatpush.msra.mxu0 0.0
      %986 = vmatpush.msra.mxu0 0.0
      %987 = vmatpush.msra.mxu0 0.0
      %988 = vmatpush.msra.mxu0 0.0
      %989 = vmatpush.msra.mxu0 0.0
      %990 = vmatpush.msra.mxu0 0.0
      %991 = vmatpush.msra.mxu0 0.0
      %992 = vmatpush.msra.mxu0 0.0
      %993 = vmatpush.msra.mxu0 0.0
      %994 = vmatpush.msra.mxu0 0.0
      %995 = vmatpush.msra.mxu0 0.0
      %996 = vmatpush.msra.mxu0 0.0
      %997 = vmatpush.msra.mxu0 0.0
      %v998 = vand.u32 %v537, 4294901760
      %999 = vmatpush.msra.mxu0 %v998
      %v1000 = vand.u32 %v523, 4294901760
      %1001 = vmatmul.f32.gmra.mxu0 %v1000
      %v1002 = vpop.f32.mrf.mxu0
      %v1003 = vadd.f32 %v969, %v1002
      %v1004 = vand.u32 %v526, 4294901760
      %1005 = vmatmul.f32.gmra.mxu0 %v1004
      %v1006 = vpop.f32.mrf.mxu0
      %v1007 = vadd.f32 %v973, %v1006
      %v1008 = vand.u32 %v529, 4294901760
      %1009 = vmatmul.f32.gmra.mxu0 %v1008
      %v1010 = vpop.f32.mrf.mxu0
      %v1011 = vadd.f32 %v977, %v1010
      %v1012 = vand.u32 %v532, 4294901760
      %1013 = vmatmul.f32.gmra.mxu0 %v1012
      %v1014 = vpop.f32.mrf.mxu0
      %v1015 = vadd.f32 %v981, %v1014
      %1016 = vdwg.mxu0
      %1018 = vst [vmem:[#allocation1] ss:$2 sm:$0xff] %v511
      %v1019 = vld.sshfl [vmem:[#allocation1] sm:$0xff pattern:$0x75316420]
      %v1020 = vld.sshfl [vmem:[#allocation1 + $0x8] sm:$0xff pattern:$0x75316420]
      %v1022 = vsel %vm521, %v507, 0
      %v1025 = vsel %vm521, %v508, 0
      %v1028 = vsel %vm521, %v509, 0
      %v1031 = vsel %vm521, %v510, 0
      %v1033 = vsel %vm534, %v1019, 0
      %v1035 = vsel %vm534, %v1020, 0
      %1037 = vmatpush.msra.mxu0 0.0
      %1038 = vmatpush.msra.mxu0 0.0
      %1039 = vmatpush.msra.mxu0 0.0
      %1040 = vmatpush.msra.mxu0 0.0
      %1041 = vmatpush.msra.mxu0 0.0
      %1042 = vmatpush.msra.mxu0 0.0
      %1043 = vmatpush.msra.mxu0 0.0
      %1044 = vmatpush.msra.mxu0 0.0
      %1045 = vmatpush.msra.mxu0 0.0
      %1046 = vmatpush.msra.mxu0 0.0
      %1047 = vmatpush.msra.mxu0 0.0
      %1048 = vmatpush.msra.mxu0 0.0
      %1049 = vmatpush.msra.mxu0 0.0
      %1050 = vmatpush.msra.mxu0 0.0
      %1051 = vmatpush.msra.mxu0 0.0
      %v1052 = vand.u32 %v1033, 4294901760
      %1053 = vmatpush.msra.mxu0 %v1052
      %v1054 = vand.u32 %v1022, 4294901760
      %v1055 = vsub.f32 %v1022, %v1054
      %v1056 = vand.u32 %v1055, 4294901760
      %v1057 = vsub.f32 %v1055, %v1056
      %v1058 = vand.u32 %v1057, 4294901760
      %1059 = vmatmul.f32.gmra.mxu0 %v1058
      %v1060 = vpop.f32.mrf.mxu0
      %v1061 = vadd.f32 %v764, %v1060
      %v1062 = vand.u32 %v1025, 4294901760
      %v1063 = vsub.f32 %v1025, %v1062
      %v1064 = vand.u32 %v1063, 4294901760
      %v1065 = vsub.f32 %v1063, %v1064
      %v1066 = vand.u32 %v1065, 4294901760
      %1067 = vmatmul.f32.gmra.mxu0 %v1066
      %v1068 = vpop.f32.mrf.mxu0
      %v1069 = vadd.f32 %v768, %v1068
      %v1070 = vand.u32 %v1028, 4294901760
      %v1071 = vsub.f32 %v1028, %v1070
      %v1072 = vand.u32 %v1071, 4294901760
      %v1073 = vsub.f32 %v1071, %v1072
      %v1074 = vand.u32 %v1073, 4294901760
      %1075 = vmatmul.f32.gmra.mxu0 %v1074
      %v1076 = vpop.f32.mrf.mxu0
      %v1077 = vadd.f32 %v772, %v1076
      %v1078 = vand.u32 %v1031, 4294901760
      %v1079 = vsub.f32 %v1031, %v1078
      %v1080 = vand.u32 %v1079, 4294901760
      %v1081 = vsub.f32 %v1079, %v1080
      %v1082 = vand.u32 %v1081, 4294901760
      %1083 = vmatmul.f32.gmra.mxu0 %v1082
      %v1084 = vpop.f32.mrf.mxu0
      %v1085 = vadd.f32 %v776, %v1084
      %1086 = vdwg.mxu0
      %1087 = vmatpush.msra.mxu0 0.0
      %1088 = vmatpush.msra.mxu0 0.0
      %1089 = vmatpush.msra.mxu0 0.0
      %1090 = vmatpush.msra.mxu0 0.0
      %1091 = vmatpush.msra.mxu0 0.0
      %1092 = vmatpush.msra.mxu0 0.0
      %1093 = vmatpush.msra.mxu0 0.0
      %1094 = vmatpush.msra.mxu0 0.0
      %1095 = vmatpush.msra.mxu0 0.0
      %1096 = vmatpush.msra.mxu0 0.0
      %1097 = vmatpush.msra.mxu0 0.0
      %1098 = vmatpush.msra.mxu0 0.0
      %1099 = vmatpush.msra.mxu0 0.0
      %1100 = vmatpush.msra.mxu0 0.0
      %1101 = vmatpush.msra.mxu0 0.0
      %v1102 = vand.u32 %v1033, 4294901760
      %v1103 = vsub.f32 %v1033, %v1102
      %v1104 = vand.u32 %v1103, 4294901760
      %v1105 = vsub.f32 %v1103, %v1104
      %v1106 = vand.u32 %v1105, 4294901760
      %1107 = vmatpush.msra.mxu0 %v1106
      %v1108 = vand.u32 %v1022, 4294901760
      %1109 = vmatmul.f32.gmra.mxu0 %v1108
      %v1110 = vpop.f32.mrf.mxu0
      %v1111 = vadd.f32 %v1061, %v1110
      %v1112 = vand.u32 %v1025, 4294901760
      %1113 = vmatmul.f32.gmra.mxu0 %v1112
      %v1114 = vpop.f32.mrf.mxu0
      %v1115 = vadd.f32 %v1069, %v1114
      %v1116 = vand.u32 %v1028, 4294901760
      %1117 = vmatmul.f32.gmra.mxu0 %v1116
      %v1118 = vpop.f32.mrf.mxu0
      %v1119 = vadd.f32 %v1077, %v1118
      %v1120 = vand.u32 %v1031, 4294901760
      %1121 = vmatmul.f32.gmra.mxu0 %v1120
      %v1122 = vpop.f32.mrf.mxu0
      %v1123 = vadd.f32 %v1085, %v1122
      %1124 = vdwg.mxu0
      %1125 = vmatpush.msra.mxu0 0.0
      %1126 = vmatpush.msra.mxu0 0.0
      %1127 = vmatpush.msra.mxu0 0.0
      %1128 = vmatpush.msra.mxu0 0.0
      %1129 = vmatpush.msra.mxu0 0.0
      %1130 = vmatpush.msra.mxu0 0.0
      %1131 = vmatpush.msra.mxu0 0.0
      %1132 = vmatpush.msra.mxu0 0.0
      %1133 = vmatpush.msra.mxu0 0.0
      %1134 = vmatpush.msra.mxu0 0.0
      %1135 = vmatpush.msra.mxu0 0.0
      %1136 = vmatpush.msra.mxu0 0.0
      %1137 = vmatpush.msra.mxu0 0.0
      %1138 = vmatpush.msra.mxu0 0.0
      %1139 = vmatpush.msra.mxu0 0.0
      %v1140 = vand.u32 %v1033, 4294901760
      %v1141 = vsub.f32 %v1033, %v1140
      %1142 = vmatpush.msra.mxu0 %v1141
      %v1143 = vand.u32 %v1022, 4294901760
      %v1144 = vsub.f32 %v1022, %v1143
      %1145 = vmatmul.f32.gmra.mxu0 %v1144
      %v1146 = vpop.f32.mrf.mxu0
      %v1147 = vadd.f32 %v1111, %v1146
      %v1148 = vand.u32 %v1025, 4294901760
      %v1149 = vsub.f32 %v1025, %v1148
      %1150 = vmatmul.f32.gmra.mxu0 %v1149
      %v1151 = vpop.f32.mrf.mxu0
      %v1152 = vadd.f32 %v1115, %v1151
      %v1153 = vand.u32 %v1028, 4294901760
      %v1154 = vsub.f32 %v1028, %v1153
      %1155 = vmatmul.f32.gmra.mxu0 %v1154
      %v1156 = vpop.f32.mrf.mxu0
      %v1157 = vadd.f32 %v1119, %v1156
      %v1158 = vand.u32 %v1031, 4294901760
      %v1159 = vsub.f32 %v1031, %v1158
      %1160 = vmatmul.f32.gmra.mxu0 %v1159
      %v1161 = vpop.f32.mrf.mxu0
      %v1162 = vadd.f32 %v1123, %v1161
      %1163 = vdwg.mxu0
      %1164 = vmatpush.msra.mxu0 0.0
      %1165 = vmatpush.msra.mxu0 0.0
      %1166 = vmatpush.msra.mxu0 0.0
      %1167 = vmatpush.msra.mxu0 0.0
      %1168 = vmatpush.msra.mxu0 0.0
      %1169 = vmatpush.msra.mxu0 0.0
      %1170 = vmatpush.msra.mxu0 0.0
      %1171 = vmatpush.msra.mxu0 0.0
      %1172 = vmatpush.msra.mxu0 0.0
      %1173 = vmatpush.msra.mxu0 0.0
      %1174 = vmatpush.msra.mxu0 0.0
      %1175 = vmatpush.msra.mxu0 0.0
      %1176 = vmatpush.msra.mxu0 0.0
      %1177 = vmatpush.msra.mxu0 0.0
      %1178 = vmatpush.msra.mxu0 0.0
      %v1179 = vand.u32 %v1033, 4294901760
      %1180 = vmatpush.msra.mxu0 %v1179
      %v1181 = vand.u32 %v1022, 4294901760
      %v1182 = vsub.f32 %v1022, %v1181
      %v1183 = vand.u32 %v1182, 4294901760
      %1184 = vmatmul.f32.gmra.mxu0 %v1183
      %v1185 = vpop.f32.mrf.mxu0
      %v1186 = vadd.f32 %v1147, %v1185
      %v1187 = vand.u32 %v1025, 4294901760
      %v1188 = vsub.f32 %v1025, %v1187
      %v1189 = vand.u32 %v1188, 4294901760
      %1190 = vmatmul.f32.gmra.mxu0 %v1189
      %v1191 = vpop.f32.mrf.mxu0
      %v1192 = vadd.f32 %v1152, %v1191
      %v1193 = vand.u32 %v1028, 4294901760
      %v1194 = vsub.f32 %v1028, %v1193
      %v1195 = vand.u32 %v1194, 4294901760
      %1196 = vmatmul.f32.gmra.mxu0 %v1195
      %v1197 = vpop.f32.mrf.mxu0
      %v1198 = vadd.f32 %v1157, %v1197
      %v1199 = vand.u32 %v1031, 4294901760
      %v1200 = vsub.f32 %v1031, %v1199
      %v1201 = vand.u32 %v1200, 4294901760
      %1202 = vmatmul.f32.gmra.mxu0 %v1201
      %v1203 = vpop.f32.mrf.mxu0
      %v1204 = vadd.f32 %v1162, %v1203
      %1205 = vdwg.mxu0
      %1206 = vmatpush.msra.mxu0 0.0
      %1207 = vmatpush.msra.mxu0 0.0
      %1208 = vmatpush.msra.mxu0 0.0
      %1209 = vmatpush.msra.mxu0 0.0
      %1210 = vmatpush.msra.mxu0 0.0
      %1211 = vmatpush.msra.mxu0 0.0
      %1212 = vmatpush.msra.mxu0 0.0
      %1213 = vmatpush.msra.mxu0 0.0
      %1214 = vmatpush.msra.mxu0 0.0
      %1215 = vmatpush.msra.mxu0 0.0
      %1216 = vmatpush.msra.mxu0 0.0
      %1217 = vmatpush.msra.mxu0 0.0
      %1218 = vmatpush.msra.mxu0 0.0
      %1219 = vmatpush.msra.mxu0 0.0
      %1220 = vmatpush.msra.mxu0 0.0
      %v1221 = vand.u32 %v1033, 4294901760
      %v1222 = vsub.f32 %v1033, %v1221
      %v1223 = vand.u32 %v1222, 4294901760
      %1224 = vmatpush.msra.mxu0 %v1223
      %v1225 = vand.u32 %v1022, 4294901760
      %1226 = vmatmul.f32.gmra.mxu0 %v1225
      %v1227 = vpop.f32.mrf.mxu0
      %v1228 = vadd.f32 %v1186, %v1227
      %v1229 = vand.u32 %v1025, 4294901760
      %1230 = vmatmul.f32.gmra.mxu0 %v1229
      %v1231 = vpop.f32.mrf.mxu0
      %v1232 = vadd.f32 %v1192, %v1231
      %v1233 = vand.u32 %v1028, 4294901760
      %1234 = vmatmul.f32.gmra.mxu0 %v1233
      %v1235 = vpop.f32.mrf.mxu0
      %v1236 = vadd.f32 %v1198, %v1235
      %v1237 = vand.u32 %v1031, 4294901760
      %1238 = vmatmul.f32.gmra.mxu0 %v1237
      %v1239 = vpop.f32.mrf.mxu0
      %v1240 = vadd.f32 %v1204, %v1239
      %1241 = vdwg.mxu0
      %1242 = vmatpush.msra.mxu0 0.0
      %1243 = vmatpush.msra.mxu0 0.0
      %1244 = vmatpush.msra.mxu0 0.0
      %1245 = vmatpush.msra.mxu0 0.0
      %1246 = vmatpush.msra.mxu0 0.0
      %1247 = vmatpush.msra.mxu0 0.0
      %1248 = vmatpush.msra.mxu0 0.0
      %1249 = vmatpush.msra.mxu0 0.0
      %1250 = vmatpush.msra.mxu0 0.0
      %1251 = vmatpush.msra.mxu0 0.0
      %1252 = vmatpush.msra.mxu0 0.0
      %1253 = vmatpush.msra.mxu0 0.0
      %1254 = vmatpush.msra.mxu0 0.0
      %1255 = vmatpush.msra.mxu0 0.0
      %1256 = vmatpush.msra.mxu0 0.0
      %v1257 = vand.u32 %v1033, 4294901760
      %1258 = vmatpush.msra.mxu0 %v1257
      %v1259 = vand.u32 %v1022, 4294901760
      %1260 = vmatmul.f32.gmra.mxu0 %v1259
      %v1261 = vpop.f32.mrf.mxu0
      %v1262 = vadd.f32 %v1228, %v1261
      %v1263 = vand.u32 %v1025, 4294901760
      %1264 = vmatmul.f32.gmra.mxu0 %v1263
      %v1265 = vpop.f32.mrf.mxu0
      %v1266 = vadd.f32 %v1232, %v1265
      %v1267 = vand.u32 %v1028, 4294901760
      %1268 = vmatmul.f32.gmra.mxu0 %v1267
      %v1269 = vpop.f32.mrf.mxu0
      %v1270 = vadd.f32 %v1236, %v1269
      %v1271 = vand.u32 %v1031, 4294901760
      %1272 = vmatmul.f32.gmra.mxu0 %v1271
      %v1273 = vpop.f32.mrf.mxu0
      %v1274 = vadd.f32 %v1240, %v1273
      %1275 = vdwg.mxu0
      %1276 = vmatpush.msra.mxu0 0.0
      %1277 = vmatpush.msra.mxu0 0.0
      %1278 = vmatpush.msra.mxu0 0.0
      %1279 = vmatpush.msra.mxu0 0.0
      %1280 = vmatpush.msra.mxu0 0.0
      %1281 = vmatpush.msra.mxu0 0.0
      %1282 = vmatpush.msra.mxu0 0.0
      %1283 = vmatpush.msra.mxu0 0.0
      %1284 = vmatpush.msra.mxu0 0.0
      %1285 = vmatpush.msra.mxu0 0.0
      %1286 = vmatpush.msra.mxu0 0.0
      %1287 = vmatpush.msra.mxu0 0.0
      %1288 = vmatpush.msra.mxu0 0.0
      %1289 = vmatpush.msra.mxu0 0.0
      %1290 = vmatpush.msra.mxu0 0.0
      %v1291 = vand.u32 %v1035, 4294901760
      %1292 = vmatpush.msra.mxu0 %v1291
      %v1293 = vand.u32 %v1022, 4294901760
      %v1294 = vsub.f32 %v1022, %v1293
      %v1295 = vand.u32 %v1294, 4294901760
      %v1296 = vsub.f32 %v1294, %v1295
      %v1297 = vand.u32 %v1296, 4294901760
      %1298 = vmatmul.f32.gmra.mxu0 %v1297
      %v1299 = vpop.f32.mrf.mxu0
      %v1300 = vadd.f32 %v1003, %v1299
      %v1301 = vand.u32 %v1025, 4294901760
      %v1302 = vsub.f32 %v1025, %v1301
      %v1303 = vand.u32 %v1302, 4294901760
      %v1304 = vsub.f32 %v1302, %v1303
      %v1305 = vand.u32 %v1304, 4294901760
      %1306 = vmatmul.f32.gmra.mxu0 %v1305
      %v1307 = vpop.f32.mrf.mxu0
      %v1308 = vadd.f32 %v1007, %v1307
      %v1309 = vand.u32 %v1028, 4294901760
      %v1310 = vsub.f32 %v1028, %v1309
      %v1311 = vand.u32 %v1310, 4294901760
      %v1312 = vsub.f32 %v1310, %v1311
      %v1313 = vand.u32 %v1312, 4294901760
      %1314 = vmatmul.f32.gmra.mxu0 %v1313
      %v1315 = vpop.f32.mrf.mxu0
      %v1316 = vadd.f32 %v1011, %v1315
      %v1317 = vand.u32 %v1031, 4294901760
      %v1318 = vsub.f32 %v1031, %v1317
      %v1319 = vand.u32 %v1318, 4294901760
      %v1320 = vsub.f32 %v1318, %v1319
      %v1321 = vand.u32 %v1320, 4294901760
      %1322 = vmatmul.f32.gmra.mxu0 %v1321
      %v1323 = vpop.f32.mrf.mxu0
      %v1324 = vadd.f32 %v1015, %v1323
      %1325 = vdwg.mxu0
      %1326 = vmatpush.msra.mxu0 0.0
      %1327 = vmatpush.msra.mxu0 0.0
      %1328 = vmatpush.msra.mxu0 0.0
      %1329 = vmatpush.msra.mxu0 0.0
      %1330 = vmatpush.msra.mxu0 0.0
      %1331 = vmatpush.msra.mxu0 0.0
      %1332 = vmatpush.msra.mxu0 0.0
      %1333 = vmatpush.msra.mxu0 0.0
      %1334 = vmatpush.msra.mxu0 0.0
      %1335 = vmatpush.msra.mxu0 0.0
      %1336 = vmatpush.msra.mxu0 0.0
      %1337 = vmatpush.msra.mxu0 0.0
      %1338 = vmatpush.msra.mxu0 0.0
      %1339 = vmatpush.msra.mxu0 0.0
      %1340 = vmatpush.msra.mxu0 0.0
      %v1341 = vand.u32 %v1035, 4294901760
      %v1342 = vsub.f32 %v1035, %v1341
      %v1343 = vand.u32 %v1342, 4294901760
      %v1344 = vsub.f32 %v1342, %v1343
      %v1345 = vand.u32 %v1344, 4294901760
      %1346 = vmatpush.msra.mxu0 %v1345
      %v1347 = vand.u32 %v1022, 4294901760
      %1348 = vmatmul.f32.gmra.mxu0 %v1347
      %v1349 = vpop.f32.mrf.mxu0
      %v1350 = vadd.f32 %v1300, %v1349
      %v1351 = vand.u32 %v1025, 4294901760
      %1352 = vmatmul.f32.gmra.mxu0 %v1351
      %v1353 = vpop.f32.mrf.mxu0
      %v1354 = vadd.f32 %v1308, %v1353
      %v1355 = vand.u32 %v1028, 4294901760
      %1356 = vmatmul.f32.gmra.mxu0 %v1355
      %v1357 = vpop.f32.mrf.mxu0
      %v1358 = vadd.f32 %v1316, %v1357
      %v1359 = vand.u32 %v1031, 4294901760
      %1360 = vmatmul.f32.gmra.mxu0 %v1359
      %v1361 = vpop.f32.mrf.mxu0
      %v1362 = vadd.f32 %v1324, %v1361
      %1363 = vdwg.mxu0
      %1364 = vmatpush.msra.mxu0 0.0
      %1365 = vmatpush.msra.mxu0 0.0
      %1366 = vmatpush.msra.mxu0 0.0
      %1367 = vmatpush.msra.mxu0 0.0
      %1368 = vmatpush.msra.mxu0 0.0
      %1369 = vmatpush.msra.mxu0 0.0
      %1370 = vmatpush.msra.mxu0 0.0
      %1371 = vmatpush.msra.mxu0 0.0
      %1372 = vmatpush.msra.mxu0 0.0
      %1373 = vmatpush.msra.mxu0 0.0
      %1374 = vmatpush.msra.mxu0 0.0
      %1375 = vmatpush.msra.mxu0 0.0
      %1376 = vmatpush.msra.mxu0 0.0
      %1377 = vmatpush.msra.mxu0 0.0
      %1378 = vmatpush.msra.mxu0 0.0
      %v1379 = vand.u32 %v1035, 4294901760
      %v1380 = vsub.f32 %v1035, %v1379
      %1381 = vmatpush.msra.mxu0 %v1380
      %v1382 = vand.u32 %v1022, 4294901760
      %v1383 = vsub.f32 %v1022, %v1382
      %1384 = vmatmul.f32.gmra.mxu0 %v1383
      %v1385 = vpop.f32.mrf.mxu0
      %v1386 = vadd.f32 %v1350, %v1385
      %v1387 = vand.u32 %v1025, 4294901760
      %v1388 = vsub.f32 %v1025, %v1387
      %1389 = vmatmul.f32.gmra.mxu0 %v1388
      %v1390 = vpop.f32.mrf.mxu0
      %v1391 = vadd.f32 %v1354, %v1390
      %v1392 = vand.u32 %v1028, 4294901760
      %v1393 = vsub.f32 %v1028, %v1392
      %1394 = vmatmul.f32.gmra.mxu0 %v1393
      %v1395 = vpop.f32.mrf.mxu0
      %v1396 = vadd.f32 %v1358, %v1395
      %v1397 = vand.u32 %v1031, 4294901760
      %v1398 = vsub.f32 %v1031, %v1397
      %1399 = vmatmul.f32.gmra.mxu0 %v1398
      %v1400 = vpop.f32.mrf.mxu0
      %v1401 = vadd.f32 %v1362, %v1400
      %1402 = vdwg.mxu0
      %1403 = vmatpush.msra.mxu0 0.0
      %1404 = vmatpush.msra.mxu0 0.0
      %1405 = vmatpush.msra.mxu0 0.0
      %1406 = vmatpush.msra.mxu0 0.0
      %1407 = vmatpush.msra.mxu0 0.0
      %1408 = vmatpush.msra.mxu0 0.0
      %1409 = vmatpush.msra.mxu0 0.0
      %1410 = vmatpush.msra.mxu0 0.0
      %1411 = vmatpush.msra.mxu0 0.0
      %1412 = vmatpush.msra.mxu0 0.0
      %1413 = vmatpush.msra.mxu0 0.0
      %1414 = vmatpush.msra.mxu0 0.0
      %1415 = vmatpush.msra.mxu0 0.0
      %1416 = vmatpush.msra.mxu0 0.0
      %1417 = vmatpush.msra.mxu0 0.0
      %v1418 = vand.u32 %v1035, 4294901760
      %1419 = vmatpush.msra.mxu0 %v1418
      %v1420 = vand.u32 %v1022, 4294901760
      %v1421 = vsub.f32 %v1022, %v1420
      %v1422 = vand.u32 %v1421, 4294901760
      %1423 = vmatmul.f32.gmra.mxu0 %v1422
      %v1424 = vpop.f32.mrf.mxu0
      %v1425 = vadd.f32 %v1386, %v1424
      %v1426 = vand.u32 %v1025, 4294901760
      %v1427 = vsub.f32 %v1025, %v1426
      %v1428 = vand.u32 %v1427, 4294901760
      %1429 = vmatmul.f32.gmra.mxu0 %v1428
      %v1430 = vpop.f32.mrf.mxu0
      %v1431 = vadd.f32 %v1391, %v1430
      %v1432 = vand.u32 %v1028, 4294901760
      %v1433 = vsub.f32 %v1028, %v1432
      %v1434 = vand.u32 %v1433, 4294901760
      %1435 = vmatmul.f32.gmra.mxu0 %v1434
      %v1436 = vpop.f32.mrf.mxu0
      %v1437 = vadd.f32 %v1396, %v1436
      %v1438 = vand.u32 %v1031, 4294901760
      %v1439 = vsub.f32 %v1031, %v1438
      %v1440 = vand.u32 %v1439, 4294901760
      %1441 = vmatmul.f32.gmra.mxu0 %v1440
      %v1442 = vpop.f32.mrf.mxu0
      %v1443 = vadd.f32 %v1401, %v1442
      %1444 = vdwg.mxu0
      %1445 = vmatpush.msra.mxu0 0.0
      %1446 = vmatpush.msra.mxu0 0.0
      %1447 = vmatpush.msra.mxu0 0.0
      %1448 = vmatpush.msra.mxu0 0.0
      %1449 = vmatpush.msra.mxu0 0.0
      %1450 = vmatpush.msra.mxu0 0.0
      %1451 = vmatpush.msra.mxu0 0.0
      %1452 = vmatpush.msra.mxu0 0.0
      %1453 = vmatpush.msra.mxu0 0.0
      %1454 = vmatpush.msra.mxu0 0.0
      %1455 = vmatpush.msra.mxu0 0.0
      %1456 = vmatpush.msra.mxu0 0.0
      %1457 = vmatpush.msra.mxu0 0.0
      %1458 = vmatpush.msra.mxu0 0.0
      %1459 = vmatpush.msra.mxu0 0.0
      %v1460 = vand.u32 %v1035, 4294901760
      %v1461 = vsub.f32 %v1035, %v1460
      %v1462 = vand.u32 %v1461, 4294901760
      %1463 = vmatpush.msra.mxu0 %v1462
      %v1464 = vand.u32 %v1022, 4294901760
      %1465 = vmatmul.f32.gmra.mxu0 %v1464
      %v1466 = vpop.f32.mrf.mxu0
      %v1467 = vadd.f32 %v1425, %v1466
      %v1468 = vand.u32 %v1025, 4294901760
      %1469 = vmatmul.f32.gmra.mxu0 %v1468
      %v1470 = vpop.f32.mrf.mxu0
      %v1471 = vadd.f32 %v1431, %v1470
      %v1472 = vand.u32 %v1028, 4294901760
      %1473 = vmatmul.f32.gmra.mxu0 %v1472
      %v1474 = vpop.f32.mrf.mxu0
      %v1475 = vadd.f32 %v1437, %v1474
      %v1476 = vand.u32 %v1031, 4294901760
      %1477 = vmatmul.f32.gmra.mxu0 %v1476
      %v1478 = vpop.f32.mrf.mxu0
      %v1479 = vadd.f32 %v1443, %v1478
      %1480 = vdwg.mxu0
      %1481 = vmatpush.msra.mxu0 0.0
      %1482 = vmatpush.msra.mxu0 0.0
      %1483 = vmatpush.msra.mxu0 0.0
      %1484 = vmatpush.msra.mxu0 0.0
      %1485 = vmatpush.msra.mxu0 0.0
      %1486 = vmatpush.msra.mxu0 0.0
      %1487 = vmatpush.msra.mxu0 0.0
      %1488 = vmatpush.msra.mxu0 0.0
      %1489 = vmatpush.msra.mxu0 0.0
      %1490 = vmatpush.msra.mxu0 0.0
      %1491 = vmatpush.msra.mxu0 0.0
      %1492 = vmatpush.msra.mxu0 0.0
      %1493 = vmatpush.msra.mxu0 0.0
      %1494 = vmatpush.msra.mxu0 0.0
      %1495 = vmatpush.msra.mxu0 0.0
      %v1496 = vand.u32 %v1035, 4294901760
      %1497 = vmatpush.msra.mxu0 %v1496
      %v1498 = vand.u32 %v1022, 4294901760
      %1499 = vmatmul.f32.gmra.mxu0 %v1498
      %v1500 = vpop.f32.mrf.mxu0
      %v1501 = vadd.f32 %v1467, %v1500
      %v1502 = vand.u32 %v1025, 4294901760
      %1503 = vmatmul.f32.gmra.mxu0 %v1502
      %v1504 = vpop.f32.mrf.mxu0
      %v1505 = vadd.f32 %v1471, %v1504
      %v1506 = vand.u32 %v1028, 4294901760
      %1507 = vmatmul.f32.gmra.mxu0 %v1506
      %v1508 = vpop.f32.mrf.mxu0
      %v1509 = vadd.f32 %v1475, %v1508
      %v1510 = vand.u32 %v1031, 4294901760
      %1511 = vmatmul.f32.gmra.mxu0 %v1510
      %v1512 = vpop.f32.mrf.mxu0
      %v1513 = vadd.f32 %v1479, %v1512
      %1514 = vdwg.mxu0
      %v1515 = vld [vmem:[%s6] sm:$0xff]
      %v1516 = vld [vmem:[%s6 + $0x8] sm:$0xff]
      %v1517 = vld [vmem:[%s6 + $0x10] sm:$0xff]
      %v1518 = vld [vmem:[%s6 + $0x18] sm:$0xff]
      %v1519 = vld [vmem:[%s485] sm:$0xff]
      %1521 = vst [vmem:[#allocation1] ss:$2 sm:$0xff] %v1519
      %v1522 = vld.sshfl [vmem:[#allocation1] sm:$0xff pattern:$0x75316420]
      %v1523 = vld.sshfl [vmem:[#allocation1 + $0x8] sm:$0xff pattern:$0x75316420]
      %v1525 = vsel %vm521, %v1515, 0
      %v1528 = vsel %vm521, %v1516, 0
      %v1531 = vsel %vm521, %v1517, 0
      %v1534 = vsel %vm521, %v1518, 0
      %v1536 = vsel %vm534, %v1522, 0
      %v1538 = vsel %vm534, %v1523, 0
      %1540 = vmatpush.msra.mxu0 0.0
      %1541 = vmatpush.msra.mxu0 0.0
      %1542 = vmatpush.msra.mxu0 0.0
      %1543 = vmatpush.msra.mxu0 0.0
      %1544 = vmatpush.msra.mxu0 0.0
      %1545 = vmatpush.msra.mxu0 0.0
      %1546 = vmatpush.msra.mxu0 0.0
      %1547 = vmatpush.msra.mxu0 0.0
      %1548 = vmatpush.msra.mxu0 0.0
      %1549 = vmatpush.msra.mxu0 0.0
      %1550 = vmatpush.msra.mxu0 0.0
      %1551 = vmatpush.msra.mxu0 0.0
      %1552 = vmatpush.msra.mxu0 0.0
      %1553 = vmatpush.msra.mxu0 0.0
      %1554 = vmatpush.msra.mxu0 0.0
      %v1555 = vand.u32 %v1536, 4294901760
      %1556 = vmatpush.msra.mxu0 %v1555
      %v1557 = vand.u32 %v1525, 4294901760
      %v1558 = vsub.f32 %v1525, %v1557
      %v1559 = vand.u32 %v1558, 4294901760
      %v1560 = vsub.f32 %v1558, %v1559
      %v1561 = vand.u32 %v1560, 4294901760
      %1562 = vmatmul.f32.gmra.mxu0 %v1561
      %v1563 = vpop.f32.mrf.mxu0
      %v1564 = vadd.f32 0.0, %v1563
      %v1565 = vand.u32 %v1528, 4294901760
      %v1566 = vsub.f32 %v1528, %v1565
      %v1567 = vand.u32 %v1566, 4294901760
      %v1568 = vsub.f32 %v1566, %v1567
      %v1569 = vand.u32 %v1568, 4294901760
      %1570 = vmatmul.f32.gmra.mxu0 %v1569
      %v1571 = vpop.f32.mrf.mxu0
      %v1572 = vadd.f32 0.0, %v1571
      %v1573 = vand.u32 %v1531, 4294901760
      %v1574 = vsub.f32 %v1531, %v1573
      %v1575 = vand.u32 %v1574, 4294901760
      %v1576 = vsub.f32 %v1574, %v1575
      %v1577 = vand.u32 %v1576, 4294901760
      %1578 = vmatmul.f32.gmra.mxu0 %v1577
      %v1579 = vpop.f32.mrf.mxu0
      %v1580 = vadd.f32 0.0, %v1579
      %v1581 = vand.u32 %v1534, 4294901760
      %v1582 = vsub.f32 %v1534, %v1581
      %v1583 = vand.u32 %v1582, 4294901760
      %v1584 = vsub.f32 %v1582, %v1583
      %v1585 = vand.u32 %v1584, 4294901760
      %1586 = vmatmul.f32.gmra.mxu0 %v1585
      %v1587 = vpop.f32.mrf.mxu0
      %v1588 = vadd.f32 0.0, %v1587
      %1589 = vdwg.mxu0
      %1590 = vmatpush.msra.mxu0 0.0
      %1591 = vmatpush.msra.mxu0 0.0
      %1592 = vmatpush.msra.mxu0 0.0
      %1593 = vmatpush.msra.mxu0 0.0
      %1594 = vmatpush.msra.mxu0 0.0
      %1595 = vmatpush.msra.mxu0 0.0
      %1596 = vmatpush.msra.mxu0 0.0
      %1597 = vmatpush.msra.mxu0 0.0
      %1598 = vmatpush.msra.mxu0 0.0
      %1599 = vmatpush.msra.mxu0 0.0
      %1600 = vmatpush.msra.mxu0 0.0
      %1601 = vmatpush.msra.mxu0 0.0
      %1602 = vmatpush.msra.mxu0 0.0
      %1603 = vmatpush.msra.mxu0 0.0
      %1604 = vmatpush.msra.mxu0 0.0
      %v1605 = vand.u32 %v1536, 4294901760
      %v1606 = vsub.f32 %v1536, %v1605
      %v1607 = vand.u32 %v1606, 4294901760
      %v1608 = vsub.f32 %v1606, %v1607
      %v1609 = vand.u32 %v1608, 4294901760
      %1610 = vmatpush.msra.mxu0 %v1609
      %v1611 = vand.u32 %v1525, 4294901760
      %1612 = vmatmul.f32.gmra.mxu0 %v1611
      %v1613 = vpop.f32.mrf.mxu0
      %v1614 = vadd.f32 %v1564, %v1613
      %v1615 = vand.u32 %v1528, 4294901760
      %1616 = vmatmul.f32.gmra.mxu0 %v1615
      %v1617 = vpop.f32.mrf.mxu0
      %v1618 = vadd.f32 %v1572, %v1617
      %v1619 = vand.u32 %v1531, 4294901760
      %1620 = vmatmul.f32.gmra.mxu0 %v1619
      %v1621 = vpop.f32.mrf.mxu0
      %v1622 = vadd.f32 %v1580, %v1621
      %v1623 = vand.u32 %v1534, 4294901760
      %1624 = vmatmul.f32.gmra.mxu0 %v1623
      %v1625 = vpop.f32.mrf.mxu0
      %v1626 = vadd.f32 %v1588, %v1625
      %1627 = vdwg.mxu0
      %1628 = vmatpush.msra.mxu0 0.0
      %1629 = vmatpush.msra.mxu0 0.0
      %1630 = vmatpush.msra.mxu0 0.0
      %1631 = vmatpush.msra.mxu0 0.0
      %1632 = vmatpush.msra.mxu0 0.0
      %1633 = vmatpush.msra.mxu0 0.0
      %1634 = vmatpush.msra.mxu0 0.0
      %1635 = vmatpush.msra.mxu0 0.0
      %1636 = vmatpush.msra.mxu0 0.0
      %1637 = vmatpush.msra.mxu0 0.0
      %1638 = vmatpush.msra.mxu0 0.0
      %1639 = vmatpush.msra.mxu0 0.0
      %1640 = vmatpush.msra.mxu0 0.0
      %1641 = vmatpush.msra.mxu0 0.0
      %1642 = vmatpush.msra.mxu0 0.0
      %v1643 = vand.u32 %v1536, 4294901760
      %v1644 = vsub.f32 %v1536, %v1643
      %1645 = vmatpush.msra.mxu0 %v1644
      %v1646 = vand.u32 %v1525, 4294901760
      %v1647 = vsub.f32 %v1525, %v1646
      %1648 = vmatmul.f32.gmra.mxu0 %v1647
      %v1649 = vpop.f32.mrf.mxu0
      %v1650 = vadd.f32 %v1614, %v1649
      %v1651 = vand.u32 %v1528, 4294901760
      %v1652 = vsub.f32 %v1528, %v1651
      %1653 = vmatmul.f32.gmra.mxu0 %v1652
      %v1654 = vpop.f32.mrf.mxu0
      %v1655 = vadd.f32 %v1618, %v1654
      %v1656 = vand.u32 %v1531, 4294901760
      %v1657 = vsub.f32 %v1531, %v1656
      %1658 = vmatmul.f32.gmra.mxu0 %v1657
      %v1659 = vpop.f32.mrf.mxu0
      %v1660 = vadd.f32 %v1622, %v1659
      %v1661 = vand.u32 %v1534, 4294901760
      %v1662 = vsub.f32 %v1534, %v1661
      %1663 = vmatmul.f32.gmra.mxu0 %v1662
      %v1664 = vpop.f32.mrf.mxu0
      %v1665 = vadd.f32 %v1626, %v1664
      %1666 = vdwg.mxu0
      %1667 = vmatpush.msra.mxu0 0.0
      %1668 = vmatpush.msra.mxu0 0.0
      %1669 = vmatpush.msra.mxu0 0.0
      %1670 = vmatpush.msra.mxu0 0.0
      %1671 = vmatpush.msra.mxu0 0.0
      %1672 = vmatpush.msra.mxu0 0.0
      %1673 = vmatpush.msra.mxu0 0.0
      %1674 = vmatpush.msra.mxu0 0.0
      %1675 = vmatpush.msra.mxu0 0.0
      %1676 = vmatpush.msra.mxu0 0.0
      %1677 = vmatpush.msra.mxu0 0.0
      %1678 = vmatpush.msra.mxu0 0.0
      %1679 = vmatpush.msra.mxu0 0.0
      %1680 = vmatpush.msra.mxu0 0.0
      %1681 = vmatpush.msra.mxu0 0.0
      %v1682 = vand.u32 %v1536, 4294901760
      %1683 = vmatpush.msra.mxu0 %v1682
      %v1684 = vand.u32 %v1525, 4294901760
      %v1685 = vsub.f32 %v1525, %v1684
      %v1686 = vand.u32 %v1685, 4294901760
      %1687 = vmatmul.f32.gmra.mxu0 %v1686
      %v1688 = vpop.f32.mrf.mxu0
      %v1689 = vadd.f32 %v1650, %v1688
      %v1690 = vand.u32 %v1528, 4294901760
      %v1691 = vsub.f32 %v1528, %v1690
      %v1692 = vand.u32 %v1691, 4294901760
      %1693 = vmatmul.f32.gmra.mxu0 %v1692
      %v1694 = vpop.f32.mrf.mxu0
      %v1695 = vadd.f32 %v1655, %v1694
      %v1696 = vand.u32 %v1531, 4294901760
      %v1697 = vsub.f32 %v1531, %v1696
      %v1698 = vand.u32 %v1697, 4294901760
      %1699 = vmatmul.f32.gmra.mxu0 %v1698
      %v1700 = vpop.f32.mrf.mxu0
      %v1701 = vadd.f32 %v1660, %v1700
      %v1702 = vand.u32 %v1534, 4294901760
      %v1703 = vsub.f32 %v1534, %v1702
      %v1704 = vand.u32 %v1703, 4294901760
      %1705 = vmatmul.f32.gmra.mxu0 %v1704
      %v1706 = vpop.f32.mrf.mxu0
      %v1707 = vadd.f32 %v1665, %v1706
      %1708 = vdwg.mxu0
      %1709 = vmatpush.msra.mxu0 0.0
      %1710 = vmatpush.msra.mxu0 0.0
      %1711 = vmatpush.msra.mxu0 0.0
      %1712 = vmatpush.msra.mxu0 0.0
      %1713 = vmatpush.msra.mxu0 0.0
      %1714 = vmatpush.msra.mxu0 0.0
      %1715 = vmatpush.msra.mxu0 0.0
      %1716 = vmatpush.msra.mxu0 0.0
      %1717 = vmatpush.msra.mxu0 0.0
      %1718 = vmatpush.msra.mxu0 0.0
      %1719 = vmatpush.msra.mxu0 0.0
      %1720 = vmatpush.msra.mxu0 0.0
      %1721 = vmatpush.msra.mxu0 0.0
      %1722 = vmatpush.msra.mxu0 0.0
      %1723 = vmatpush.msra.mxu0 0.0
      %v1724 = vand.u32 %v1536, 4294901760
      %v1725 = vsub.f32 %v1536, %v1724
      %v1726 = vand.u32 %v1725, 4294901760
      %1727 = vmatpush.msra.mxu0 %v1726
      %v1728 = vand.u32 %v1525, 4294901760
      %1729 = vmatmul.f32.gmra.mxu0 %v1728
      %v1730 = vpop.f32.mrf.mxu0
      %v1731 = vadd.f32 %v1689, %v1730
      %v1732 = vand.u32 %v1528, 4294901760
      %1733 = vmatmul.f32.gmra.mxu0 %v1732
      %v1734 = vpop.f32.mrf.mxu0
      %v1735 = vadd.f32 %v1695, %v1734
      %v1736 = vand.u32 %v1531, 4294901760
      %1737 = vmatmul.f32.gmra.mxu0 %v1736
      %v1738 = vpop.f32.mrf.mxu0
      %v1739 = vadd.f32 %v1701, %v1738
      %v1740 = vand.u32 %v1534, 4294901760
      %1741 = vmatmul.f32.gmra.mxu0 %v1740
      %v1742 = vpop.f32.mrf.mxu0
      %v1743 = vadd.f32 %v1707, %v1742
      %1744 = vdwg.mxu0
      %1745 = vmatpush.msra.mxu0 0.0
      %1746 = vmatpush.msra.mxu0 0.0
      %1747 = vmatpush.msra.mxu0 0.0
      %1748 = vmatpush.msra.mxu0 0.0
      %1749 = vmatpush.msra.mxu0 0.0
      %1750 = vmatpush.msra.mxu0 0.0
      %1751 = vmatpush.msra.mxu0 0.0
      %1752 = vmatpush.msra.mxu0 0.0
      %1753 = vmatpush.msra.mxu0 0.0
      %1754 = vmatpush.msra.mxu0 0.0
      %1755 = vmatpush.msra.mxu0 0.0
      %1756 = vmatpush.msra.mxu0 0.0
      %1757 = vmatpush.msra.mxu0 0.0
      %1758 = vmatpush.msra.mxu0 0.0
      %1759 = vmatpush.msra.mxu0 0.0
      %v1760 = vand.u32 %v1536, 4294901760
      %1761 = vmatpush.msra.mxu0 %v1760
      %v1762 = vand.u32 %v1525, 4294901760
      %1763 = vmatmul.f32.gmra.mxu0 %v1762
      %v1764 = vpop.f32.mrf.mxu0
      %v1765 = vadd.f32 %v1731, %v1764
      %v1766 = vand.u32 %v1528, 4294901760
      %1767 = vmatmul.f32.gmra.mxu0 %v1766
      %v1768 = vpop.f32.mrf.mxu0
      %v1769 = vadd.f32 %v1735, %v1768
      %v1770 = vand.u32 %v1531, 4294901760
      %1771 = vmatmul.f32.gmra.mxu0 %v1770
      %v1772 = vpop.f32.mrf.mxu0
      %v1773 = vadd.f32 %v1739, %v1772
      %v1774 = vand.u32 %v1534, 4294901760
      %1775 = vmatmul.f32.gmra.mxu0 %v1774
      %v1776 = vpop.f32.mrf.mxu0
      %v1777 = vadd.f32 %v1743, %v1776
      %1778 = vdwg.mxu0
      %1779 = vmatpush.msra.mxu0 0.0
      %1780 = vmatpush.msra.mxu0 0.0
      %1781 = vmatpush.msra.mxu0 0.0
      %1782 = vmatpush.msra.mxu0 0.0
      %1783 = vmatpush.msra.mxu0 0.0
      %1784 = vmatpush.msra.mxu0 0.0
      %1785 = vmatpush.msra.mxu0 0.0
      %1786 = vmatpush.msra.mxu0 0.0
      %1787 = vmatpush.msra.mxu0 0.0
      %1788 = vmatpush.msra.mxu0 0.0
      %1789 = vmatpush.msra.mxu0 0.0
      %1790 = vmatpush.msra.mxu0 0.0
      %1791 = vmatpush.msra.mxu0 0.0
      %1792 = vmatpush.msra.mxu0 0.0
      %1793 = vmatpush.msra.mxu0 0.0
      %v1794 = vand.u32 %v1538, 4294901760
      %1795 = vmatpush.msra.mxu0 %v1794
      %v1796 = vand.u32 %v1525, 4294901760
      %v1797 = vsub.f32 %v1525, %v1796
      %v1798 = vand.u32 %v1797, 4294901760
      %v1799 = vsub.f32 %v1797, %v1798
      %v1800 = vand.u32 %v1799, 4294901760
      %1801 = vmatmul.f32.gmra.mxu0 %v1800
      %v1802 = vpop.f32.mrf.mxu0
      %v1803 = vadd.f32 0.0, %v1802
      %v1804 = vand.u32 %v1528, 4294901760
      %v1805 = vsub.f32 %v1528, %v1804
      %v1806 = vand.u32 %v1805, 4294901760
      %v1807 = vsub.f32 %v1805, %v1806
      %v1808 = vand.u32 %v1807, 4294901760
      %1809 = vmatmul.f32.gmra.mxu0 %v1808
      %v1810 = vpop.f32.mrf.mxu0
      %v1811 = vadd.f32 0.0, %v1810
      %v1812 = vand.u32 %v1531, 4294901760
      %v1813 = vsub.f32 %v1531, %v1812
      %v1814 = vand.u32 %v1813, 4294901760
      %v1815 = vsub.f32 %v1813, %v1814
      %v1816 = vand.u32 %v1815, 4294901760
      %1817 = vmatmul.f32.gmra.mxu0 %v1816
      %v1818 = vpop.f32.mrf.mxu0
      %v1819 = vadd.f32 0.0, %v1818
      %v1820 = vand.u32 %v1534, 4294901760
      %v1821 = vsub.f32 %v1534, %v1820
      %v1822 = vand.u32 %v1821, 4294901760
      %v1823 = vsub.f32 %v1821, %v1822
      %v1824 = vand.u32 %v1823, 4294901760
      %1825 = vmatmul.f32.gmra.mxu0 %v1824
      %v1826 = vpop.f32.mrf.mxu0
      %v1827 = vadd.f32 0.0, %v1826
      %1828 = vdwg.mxu0
      %1829 = vmatpush.msra.mxu0 0.0
      %1830 = vmatpush.msra.mxu0 0.0
      %1831 = vmatpush.msra.mxu0 0.0
      %1832 = vmatpush.msra.mxu0 0.0
      %1833 = vmatpush.msra.mxu0 0.0
      %1834 = vmatpush.msra.mxu0 0.0
      %1835 = vmatpush.msra.mxu0 0.0
      %1836 = vmatpush.msra.mxu0 0.0
      %1837 = vmatpush.msra.mxu0 0.0
      %1838 = vmatpush.msra.mxu0 0.0
      %1839 = vmatpush.msra.mxu0 0.0
      %1840 = vmatpush.msra.mxu0 0.0
      %1841 = vmatpush.msra.mxu0 0.0
      %1842 = vmatpush.msra.mxu0 0.0
      %1843 = vmatpush.msra.mxu0 0.0
      %v1844 = vand.u32 %v1538, 4294901760
      %v1845 = vsub.f32 %v1538, %v1844
      %v1846 = vand.u32 %v1845, 4294901760
      %v1847 = vsub.f32 %v1845, %v1846
      %v1848 = vand.u32 %v1847, 4294901760
      %1849 = vmatpush.msra.mxu0 %v1848
      %v1850 = vand.u32 %v1525, 4294901760
      %1851 = vmatmul.f32.gmra.mxu0 %v1850
      %v1852 = vpop.f32.mrf.mxu0
      %v1853 = vadd.f32 %v1803, %v1852
      %v1854 = vand.u32 %v1528, 4294901760
      %1855 = vmatmul.f32.gmra.mxu0 %v1854
      %v1856 = vpop.f32.mrf.mxu0
      %v1857 = vadd.f32 %v1811, %v1856
      %v1858 = vand.u32 %v1531, 4294901760
      %1859 = vmatmul.f32.gmra.mxu0 %v1858
      %v1860 = vpop.f32.mrf.mxu0
      %v1861 = vadd.f32 %v1819, %v1860
      %v1862 = vand.u32 %v1534, 4294901760
      %1863 = vmatmul.f32.gmra.mxu0 %v1862
      %v1864 = vpop.f32.mrf.mxu0
      %v1865 = vadd.f32 %v1827, %v1864
      %1866 = vdwg.mxu0
      %1867 = vmatpush.msra.mxu0 0.0
      %1868 = vmatpush.msra.mxu0 0.0
      %1869 = vmatpush.msra.mxu0 0.0
      %1870 = vmatpush.msra.mxu0 0.0
      %1871 = vmatpush.msra.mxu0 0.0
      %1872 = vmatpush.msra.mxu0 0.0
      %1873 = vmatpush.msra.mxu0 0.0
      %1874 = vmatpush.msra.mxu0 0.0
      %1875 = vmatpush.msra.mxu0 0.0
      %1876 = vmatpush.msra.mxu0 0.0
      %1877 = vmatpush.msra.mxu0 0.0
      %1878 = vmatpush.msra.mxu0 0.0
      %1879 = vmatpush.msra.mxu0 0.0
      %1880 = vmatpush.msra.mxu0 0.0
      %1881 = vmatpush.msra.mxu0 0.0
      %v1882 = vand.u32 %v1538, 4294901760
      %v1883 = vsub.f32 %v1538, %v1882
      %1884 = vmatpush.msra.mxu0 %v1883
      %v1885 = vand.u32 %v1525, 4294901760
      %v1886 = vsub.f32 %v1525, %v1885
      %1887 = vmatmul.f32.gmra.mxu0 %v1886
      %v1888 = vpop.f32.mrf.mxu0
      %v1889 = vadd.f32 %v1853, %v1888
      %v1890 = vand.u32 %v1528, 4294901760
      %v1891 = vsub.f32 %v1528, %v1890
      %1892 = vmatmul.f32.gmra.mxu0 %v1891
      %v1893 = vpop.f32.mrf.mxu0
      %v1894 = vadd.f32 %v1857, %v1893
      %v1895 = vand.u32 %v1531, 4294901760
      %v1896 = vsub.f32 %v1531, %v1895
      %1897 = vmatmul.f32.gmra.mxu0 %v1896
      %v1898 = vpop.f32.mrf.mxu0
      %v1899 = vadd.f32 %v1861, %v1898
      %v1900 = vand.u32 %v1534, 4294901760
      %v1901 = vsub.f32 %v1534, %v1900
      %1902 = vmatmul.f32.gmra.mxu0 %v1901
      %v1903 = vpop.f32.mrf.mxu0
      %v1904 = vadd.f32 %v1865, %v1903
      %1905 = vdwg.mxu0
      %1906 = vmatpush.msra.mxu0 0.0
      %1907 = vmatpush.msra.mxu0 0.0
      %1908 = vmatpush.msra.mxu0 0.0
      %1909 = vmatpush.msra.mxu0 0.0
      %1910 = vmatpush.msra.mxu0 0.0
      %1911 = vmatpush.msra.mxu0 0.0
      %1912 = vmatpush.msra.mxu0 0.0
      %1913 = vmatpush.msra.mxu0 0.0
      %1914 = vmatpush.msra.mxu0 0.0
      %1915 = vmatpush.msra.mxu0 0.0
      %1916 = vmatpush.msra.mxu0 0.0
      %1917 = vmatpush.msra.mxu0 0.0
      %1918 = vmatpush.msra.mxu0 0.0
      %1919 = vmatpush.msra.mxu0 0.0
      %1920 = vmatpush.msra.mxu0 0.0
      %v1921 = vand.u32 %v1538, 4294901760
      %1922 = vmatpush.msra.mxu0 %v1921
      %v1923 = vand.u32 %v1525, 4294901760
      %v1924 = vsub.f32 %v1525, %v1923
      %v1925 = vand.u32 %v1924, 4294901760
      %1926 = vmatmul.f32.gmra.mxu0 %v1925
      %v1927 = vpop.f32.mrf.mxu0
      %v1928 = vadd.f32 %v1889, %v1927
      %v1929 = vand.u32 %v1528, 4294901760
      %v1930 = vsub.f32 %v1528, %v1929
      %v1931 = vand.u32 %v1930, 4294901760
      %1932 = vmatmul.f32.gmra.mxu0 %v1931
      %v1933 = vpop.f32.mrf.mxu0
      %v1934 = vadd.f32 %v1894, %v1933
      %v1935 = vand.u32 %v1531, 4294901760
      %v1936 = vsub.f32 %v1531, %v1935
      %v1937 = vand.u32 %v1936, 4294901760
      %1938 = vmatmul.f32.gmra.mxu0 %v1937
      %v1939 = vpop.f32.mrf.mxu0
      %v1940 = vadd.f32 %v1899, %v1939
      %v1941 = vand.u32 %v1534, 4294901760
      %v1942 = vsub.f32 %v1534, %v1941
      %v1943 = vand.u32 %v1942, 4294901760
      %1944 = vmatmul.f32.gmra.mxu0 %v1943
      %v1945 = vpop.f32.mrf.mxu0
      %v1946 = vadd.f32 %v1904, %v1945
      %1947 = vdwg.mxu0
      %1948 = vmatpush.msra.mxu0 0.0
      %1949 = vmatpush.msra.mxu0 0.0
      %1950 = vmatpush.msra.mxu0 0.0
      %1951 = vmatpush.msra.mxu0 0.0
      %1952 = vmatpush.msra.mxu0 0.0
      %1953 = vmatpush.msra.mxu0 0.0
      %1954 = vmatpush.msra.mxu0 0.0
      %1955 = vmatpush.msra.mxu0 0.0
      %1956 = vmatpush.msra.mxu0 0.0
      %1957 = vmatpush.msra.mxu0 0.0
      %1958 = vmatpush.msra.mxu0 0.0
      %1959 = vmatpush.msra.mxu0 0.0
      %1960 = vmatpush.msra.mxu0 0.0
      %1961 = vmatpush.msra.mxu0 0.0
      %1962 = vmatpush.msra.mxu0 0.0
      %v1963 = vand.u32 %v1538, 4294901760
      %v1964 = vsub.f32 %v1538, %v1963
      %v1965 = vand.u32 %v1964, 4294901760
      %1966 = vmatpush.msra.mxu0 %v1965
      %v1967 = vand.u32 %v1525, 4294901760
      %1968 = vmatmul.f32.gmra.mxu0 %v1967
      %v1969 = vpop.f32.mrf.mxu0
      %v1970 = vadd.f32 %v1928, %v1969
      %v1971 = vand.u32 %v1528, 4294901760
      %1972 = vmatmul.f32.gmra.mxu0 %v1971
      %v1973 = vpop.f32.mrf.mxu0
      %v1974 = vadd.f32 %v1934, %v1973
      %v1975 = vand.u32 %v1531, 4294901760
      %1976 = vmatmul.f32.gmra.mxu0 %v1975
      %v1977 = vpop.f32.mrf.mxu0
      %v1978 = vadd.f32 %v1940, %v1977
      %v1979 = vand.u32 %v1534, 4294901760
      %1980 = vmatmul.f32.gmra.mxu0 %v1979
      %v1981 = vpop.f32.mrf.mxu0
      %v1982 = vadd.f32 %v1946, %v1981
      %1983 = vdwg.mxu0
      %1984 = vmatpush.msra.mxu0 0.0
      %1985 = vmatpush.msra.mxu0 0.0
      %1986 = vmatpush.msra.mxu0 0.0
      %1987 = vmatpush.msra.mxu0 0.0
      %1988 = vmatpush.msra.mxu0 0.0
      %1989 = vmatpush.msra.mxu0 0.0
      %1990 = vmatpush.msra.mxu0 0.0
      %1991 = vmatpush.msra.mxu0 0.0
      %1992 = vmatpush.msra.mxu0 0.0
      %1993 = vmatpush.msra.mxu0 0.0
      %1994 = vmatpush.msra.mxu0 0.0
      %1995 = vmatpush.msra.mxu0 0.0
      %1996 = vmatpush.msra.mxu0 0.0
      %1997 = vmatpush.msra.mxu0 0.0
      %1998 = vmatpush.msra.mxu0 0.0
      %v1999 = vand.u32 %v1538, 4294901760
      %2000 = vmatpush.msra.mxu0 %v1999
      %v2001 = vand.u32 %v1525, 4294901760
      %2002 = vmatmul.f32.gmra.mxu0 %v2001
      %v2003 = vpop.f32.mrf.mxu0
      %v2004 = vadd.f32 %v1970, %v2003
      %v2005 = vand.u32 %v1528, 4294901760
      %2006 = vmatmul.f32.gmra.mxu0 %v2005
      %v2007 = vpop.f32.mrf.mxu0
      %v2008 = vadd.f32 %v1974, %v2007
      %v2009 = vand.u32 %v1531, 4294901760
      %2010 = vmatmul.f32.gmra.mxu0 %v2009
      %v2011 = vpop.f32.mrf.mxu0
      %v2012 = vadd.f32 %v1978, %v2011
      %v2013 = vand.u32 %v1534, 4294901760
      %2014 = vmatmul.f32.gmra.mxu0 %v2013
      %v2015 = vpop.f32.mrf.mxu0
      %v2016 = vadd.f32 %v1982, %v2015
      %2017 = vdwg.mxu0
      %v2018 = vadd.f32 %v1262, %v1765
      %v2019 = vadd.f32 %v1501, %v2004
      %v2020 = vadd.f32 %v1266, %v1769
      %v2021 = vadd.f32 %v1505, %v2008
      %v2022 = vadd.f32 %v1270, %v1773
      %v2023 = vadd.f32 %v1509, %v2012
      %v2024 = vadd.f32 %v1274, %v1777
      %v2025 = vadd.f32 %v1513, %v2016
      %v2026 = vld [vmem:[%s7] sm:$0xff]
      %v2027 = vld [vmem:[%s7 + $0x8] sm:$0xff]
      %v2028 = vld [vmem:[%s7 + $0x10] sm:$0xff]
      %v2029 = vld [vmem:[%s7 + $0x18] sm:$0xff]
      %v2030 = vld [vmem:[%s495] sm:$0xff]
      %2032 = vst [vmem:[#allocation1] ss:$2 sm:$0xff] %v2030
      %v2033 = vld.sshfl [vmem:[#allocation1] sm:$0xff pattern:$0x75316420]
      %v2034 = vld.sshfl [vmem:[#allocation1 + $0x8] sm:$0xff pattern:$0x75316420]
      %v2036 = vsel %vm521, %v2026, 0
      %v2039 = vsel %vm521, %v2027, 0
      %v2042 = vsel %vm521, %v2028, 0
      %v2045 = vsel %vm521, %v2029, 0
      %v2047 = vsel %vm534, %v2033, 0
      %v2049 = vsel %vm534, %v2034, 0
      %2051 = vmatpush.msra.mxu0 0.0
      %2052 = vmatpush.msra.mxu0 0.0
      %2053 = vmatpush.msra.mxu0 0.0
      %2054 = vmatpush.msra.mxu0 0.0
      %2055 = vmatpush.msra.mxu0 0.0
      %2056 = vmatpush.msra.mxu0 0.0
      %2057 = vmatpush.msra.mxu0 0.0
      %2058 = vmatpush.msra.mxu0 0.0
      %2059 = vmatpush.msra.mxu0 0.0
      %2060 = vmatpush.msra.mxu0 0.0
      %2061 = vmatpush.msra.mxu0 0.0
      %2062 = vmatpush.msra.mxu0 0.0
      %2063 = vmatpush.msra.mxu0 0.0
      %2064 = vmatpush.msra.mxu0 0.0
      %2065 = vmatpush.msra.mxu0 0.0
      %v2066 = vand.u32 %v2047, 4294901760
      %2067 = vmatpush.msra.mxu0 %v2066
      %v2068 = vand.u32 %v2036, 4294901760
      %v2069 = vsub.f32 %v2036, %v2068
      %v2070 = vand.u32 %v2069, 4294901760
      %v2071 = vsub.f32 %v2069, %v2070
      %v2072 = vand.u32 %v2071, 4294901760
      %2073 = vmatmul.f32.gmra.mxu0 %v2072
      %v2074 = vpop.f32.mrf.mxu0
      %v2075 = vadd.f32 0.0, %v2074
      %v2076 = vand.u32 %v2039, 4294901760
      %v2077 = vsub.f32 %v2039, %v2076
      %v2078 = vand.u32 %v2077, 4294901760
      %v2079 = vsub.f32 %v2077, %v2078
      %v2080 = vand.u32 %v2079, 4294901760
      %2081 = vmatmul.f32.gmra.mxu0 %v2080
      %v2082 = vpop.f32.mrf.mxu0
      %v2083 = vadd.f32 0.0, %v2082
      %v2084 = vand.u32 %v2042, 4294901760
      %v2085 = vsub.f32 %v2042, %v2084
      %v2086 = vand.u32 %v2085, 4294901760
      %v2087 = vsub.f32 %v2085, %v2086
      %v2088 = vand.u32 %v2087, 4294901760
      %2089 = vmatmul.f32.gmra.mxu0 %v2088
      %v2090 = vpop.f32.mrf.mxu0
      %v2091 = vadd.f32 0.0, %v2090
      %v2092 = vand.u32 %v2045, 4294901760
      %v2093 = vsub.f32 %v2045, %v2092
      %v2094 = vand.u32 %v2093, 4294901760
      %v2095 = vsub.f32 %v2093, %v2094
      %v2096 = vand.u32 %v2095, 4294901760
      %2097 = vmatmul.f32.gmra.mxu0 %v2096
      %v2098 = vpop.f32.mrf.mxu0
      %v2099 = vadd.f32 0.0, %v2098
      %2100 = vdwg.mxu0
      %2101 = vmatpush.msra.mxu0 0.0
      %2102 = vmatpush.msra.mxu0 0.0
      %2103 = vmatpush.msra.mxu0 0.0
      %2104 = vmatpush.msra.mxu0 0.0
      %2105 = vmatpush.msra.mxu0 0.0
      %2106 = vmatpush.msra.mxu0 0.0
      %2107 = vmatpush.msra.mxu0 0.0
      %2108 = vmatpush.msra.mxu0 0.0
      %2109 = vmatpush.msra.mxu0 0.0
      %2110 = vmatpush.msra.mxu0 0.0
      %2111 = vmatpush.msra.mxu0 0.0
      %2112 = vmatpush.msra.mxu0 0.0
      %2113 = vmatpush.msra.mxu0 0.0
      %2114 = vmatpush.msra.mxu0 0.0
      %2115 = vmatpush.msra.mxu0 0.0
      %v2116 = vand.u32 %v2047, 4294901760
      %v2117 = vsub.f32 %v2047, %v2116
      %v2118 = vand.u32 %v2117, 4294901760
      %v2119 = vsub.f32 %v2117, %v2118
      %v2120 = vand.u32 %v2119, 4294901760
      %2121 = vmatpush.msra.mxu0 %v2120
      %v2122 = vand.u32 %v2036, 4294901760
      %2123 = vmatmul.f32.gmra.mxu0 %v2122
      %v2124 = vpop.f32.mrf.mxu0
      %v2125 = vadd.f32 %v2075, %v2124
      %v2126 = vand.u32 %v2039, 4294901760
      %2127 = vmatmul.f32.gmra.mxu0 %v2126
      %v2128 = vpop.f32.mrf.mxu0
      %v2129 = vadd.f32 %v2083, %v2128
      %v2130 = vand.u32 %v2042, 4294901760
      %2131 = vmatmul.f32.gmra.mxu0 %v2130
      %v2132 = vpop.f32.mrf.mxu0
      %v2133 = vadd.f32 %v2091, %v2132
      %v2134 = vand.u32 %v2045, 4294901760
      %2135 = vmatmul.f32.gmra.mxu0 %v2134
      %v2136 = vpop.f32.mrf.mxu0
      %v2137 = vadd.f32 %v2099, %v2136
      %2138 = vdwg.mxu0
      %2139 = vmatpush.msra.mxu0 0.0
      %2140 = vmatpush.msra.mxu0 0.0
      %2141 = vmatpush.msra.mxu0 0.0
      %2142 = vmatpush.msra.mxu0 0.0
      %2143 = vmatpush.msra.mxu0 0.0
      %2144 = vmatpush.msra.mxu0 0.0
      %2145 = vmatpush.msra.mxu0 0.0
      %2146 = vmatpush.msra.mxu0 0.0
      %2147 = vmatpush.msra.mxu0 0.0
      %2148 = vmatpush.msra.mxu0 0.0
      %2149 = vmatpush.msra.mxu0 0.0
      %2150 = vmatpush.msra.mxu0 0.0
      %2151 = vmatpush.msra.mxu0 0.0
      %2152 = vmatpush.msra.mxu0 0.0
      %2153 = vmatpush.msra.mxu0 0.0
      %v2154 = vand.u32 %v2047, 4294901760
      %v2155 = vsub.f32 %v2047, %v2154
      %2156 = vmatpush.msra.mxu0 %v2155
      %v2157 = vand.u32 %v2036, 4294901760
      %v2158 = vsub.f32 %v2036, %v2157
      %2159 = vmatmul.f32.gmra.mxu0 %v2158
      %v2160 = vpop.f32.mrf.mxu0
      %v2161 = vadd.f32 %v2125, %v2160
      %v2162 = vand.u32 %v2039, 4294901760
      %v2163 = vsub.f32 %v2039, %v2162
      %2164 = vmatmul.f32.gmra.mxu0 %v2163
      %v2165 = vpop.f32.mrf.mxu0
      %v2166 = vadd.f32 %v2129, %v2165
      %v2167 = vand.u32 %v2042, 4294901760
      %v2168 = vsub.f32 %v2042, %v2167
      %2169 = vmatmul.f32.gmra.mxu0 %v2168
      %v2170 = vpop.f32.mrf.mxu0
      %v2171 = vadd.f32 %v2133, %v2170
      %v2172 = vand.u32 %v2045, 4294901760
      %v2173 = vsub.f32 %v2045, %v2172
      %2174 = vmatmul.f32.gmra.mxu0 %v2173
      %v2175 = vpop.f32.mrf.mxu0
      %v2176 = vadd.f32 %v2137, %v2175
      %2177 = vdwg.mxu0
      %2178 = vmatpush.msra.mxu0 0.0
      %2179 = vmatpush.msra.mxu0 0.0
      %2180 = vmatpush.msra.mxu0 0.0
      %2181 = vmatpush.msra.mxu0 0.0
      %2182 = vmatpush.msra.mxu0 0.0
      %2183 = vmatpush.msra.mxu0 0.0
      %2184 = vmatpush.msra.mxu0 0.0
      %2185 = vmatpush.msra.mxu0 0.0
      %2186 = vmatpush.msra.mxu0 0.0
      %2187 = vmatpush.msra.mxu0 0.0
      %2188 = vmatpush.msra.mxu0 0.0
      %2189 = vmatpush.msra.mxu0 0.0
      %2190 = vmatpush.msra.mxu0 0.0
      %2191 = vmatpush.msra.mxu0 0.0
      %2192 = vmatpush.msra.mxu0 0.0
      %v2193 = vand.u32 %v2047, 4294901760
      %2194 = vmatpush.msra.mxu0 %v2193
      %v2195 = vand.u32 %v2036, 4294901760
      %v2196 = vsub.f32 %v2036, %v2195
      %v2197 = vand.u32 %v2196, 4294901760
      %2198 = vmatmul.f32.gmra.mxu0 %v2197
      %v2199 = vpop.f32.mrf.mxu0
      %v2200 = vadd.f32 %v2161, %v2199
      %v2201 = vand.u32 %v2039, 4294901760
      %v2202 = vsub.f32 %v2039, %v2201
      %v2203 = vand.u32 %v2202, 4294901760
      %2204 = vmatmul.f32.gmra.mxu0 %v2203
      %v2205 = vpop.f32.mrf.mxu0
      %v2206 = vadd.f32 %v2166, %v2205
      %v2207 = vand.u32 %v2042, 4294901760
      %v2208 = vsub.f32 %v2042, %v2207
      %v2209 = vand.u32 %v2208, 4294901760
      %2210 = vmatmul.f32.gmra.mxu0 %v2209
      %v2211 = vpop.f32.mrf.mxu0
      %v2212 = vadd.f32 %v2171, %v2211
      %v2213 = vand.u32 %v2045, 4294901760
      %v2214 = vsub.f32 %v2045, %v2213
      %v2215 = vand.u32 %v2214, 4294901760
      %2216 = vmatmul.f32.gmra.mxu0 %v2215
      %v2217 = vpop.f32.mrf.mxu0
      %v2218 = vadd.f32 %v2176, %v2217
      %2219 = vdwg.mxu0
      %2220 = vmatpush.msra.mxu0 0.0
      %2221 = vmatpush.msra.mxu0 0.0
      %2222 = vmatpush.msra.mxu0 0.0
      %2223 = vmatpush.msra.mxu0 0.0
      %2224 = vmatpush.msra.mxu0 0.0
      %2225 = vmatpush.msra.mxu0 0.0
      %2226 = vmatpush.msra.mxu0 0.0
      %2227 = vmatpush.msra.mxu0 0.0
      %2228 = vmatpush.msra.mxu0 0.0
      %2229 = vmatpush.msra.mxu0 0.0
      %2230 = vmatpush.msra.mxu0 0.0
      %2231 = vmatpush.msra.mxu0 0.0
      %2232 = vmatpush.msra.mxu0 0.0
      %2233 = vmatpush.msra.mxu0 0.0
      %2234 = vmatpush.msra.mxu0 0.0
      %v2235 = vand.u32 %v2047, 4294901760
      %v2236 = vsub.f32 %v2047, %v2235
      %v2237 = vand.u32 %v2236, 4294901760
      %2238 = vmatpush.msra.mxu0 %v2237
      %v2239 = vand.u32 %v2036, 4294901760
      %2240 = vmatmul.f32.gmra.mxu0 %v2239
      %v2241 = vpop.f32.mrf.mxu0
      %v2242 = vadd.f32 %v2200, %v2241
      %v2243 = vand.u32 %v2039, 4294901760
      %2244 = vmatmul.f32.gmra.mxu0 %v2243
      %v2245 = vpop.f32.mrf.mxu0
      %v2246 = vadd.f32 %v2206, %v2245
      %v2247 = vand.u32 %v2042, 4294901760
      %2248 = vmatmul.f32.gmra.mxu0 %v2247
      %v2249 = vpop.f32.mrf.mxu0
      %v2250 = vadd.f32 %v2212, %v2249
      %v2251 = vand.u32 %v2045, 4294901760
      %2252 = vmatmul.f32.gmra.mxu0 %v2251
      %v2253 = vpop.f32.mrf.mxu0
      %v2254 = vadd.f32 %v2218, %v2253
      %2255 = vdwg.mxu0
      %2256 = vmatpush.msra.mxu0 0.0
      %2257 = vmatpush.msra.mxu0 0.0
      %2258 = vmatpush.msra.mxu0 0.0
      %2259 = vmatpush.msra.mxu0 0.0
      %2260 = vmatpush.msra.mxu0 0.0
      %2261 = vmatpush.msra.mxu0 0.0
      %2262 = vmatpush.msra.mxu0 0.0
      %2263 = vmatpush.msra.mxu0 0.0
      %2264 = vmatpush.msra.mxu0 0.0
      %2265 = vmatpush.msra.mxu0 0.0
      %2266 = vmatpush.msra.mxu0 0.0
      %2267 = vmatpush.msra.mxu0 0.0
      %2268 = vmatpush.msra.mxu0 0.0
      %2269 = vmatpush.msra.mxu0 0.0
      %2270 = vmatpush.msra.mxu0 0.0
      %v2271 = vand.u32 %v2047, 4294901760
      %2272 = vmatpush.msra.mxu0 %v2271
      %v2273 = vand.u32 %v2036, 4294901760
      %2274 = vmatmul.f32.gmra.mxu0 %v2273
      %v2275 = vpop.f32.mrf.mxu0
      %v2276 = vadd.f32 %v2242, %v2275
      %v2277 = vand.u32 %v2039, 4294901760
      %2278 = vmatmul.f32.gmra.mxu0 %v2277
      %v2279 = vpop.f32.mrf.mxu0
      %v2280 = vadd.f32 %v2246, %v2279
      %v2281 = vand.u32 %v2042, 4294901760
      %2282 = vmatmul.f32.gmra.mxu0 %v2281
      %v2283 = vpop.f32.mrf.mxu0
      %v2284 = vadd.f32 %v2250, %v2283
      %v2285 = vand.u32 %v2045, 4294901760
      %2286 = vmatmul.f32.gmra.mxu0 %v2285
      %v2287 = vpop.f32.mrf.mxu0
      %v2288 = vadd.f32 %v2254, %v2287
      %2289 = vdwg.mxu0
      %2290 = vmatpush.msra.mxu0 0.0
      %2291 = vmatpush.msra.mxu0 0.0
      %2292 = vmatpush.msra.mxu0 0.0
      %2293 = vmatpush.msra.mxu0 0.0
      %2294 = vmatpush.msra.mxu0 0.0
      %2295 = vmatpush.msra.mxu0 0.0
      %2296 = vmatpush.msra.mxu0 0.0
      %2297 = vmatpush.msra.mxu0 0.0
      %2298 = vmatpush.msra.mxu0 0.0
      %2299 = vmatpush.msra.mxu0 0.0
      %2300 = vmatpush.msra.mxu0 0.0
      %2301 = vmatpush.msra.mxu0 0.0
      %2302 = vmatpush.msra.mxu0 0.0
      %2303 = vmatpush.msra.mxu0 0.0
      %2304 = vmatpush.msra.mxu0 0.0
      %v2305 = vand.u32 %v2049, 4294901760
      %2306 = vmatpush.msra.mxu0 %v2305
      %v2307 = vand.u32 %v2036, 4294901760
      %v2308 = vsub.f32 %v2036, %v2307
      %v2309 = vand.u32 %v2308, 4294901760
      %v2310 = vsub.f32 %v2308, %v2309
      %v2311 = vand.u32 %v2310, 4294901760
      %2312 = vmatmul.f32.gmra.mxu0 %v2311
      %v2313 = vpop.f32.mrf.mxu0
      %v2314 = vadd.f32 0.0, %v2313
      %v2315 = vand.u32 %v2039, 4294901760
      %v2316 = vsub.f32 %v2039, %v2315
      %v2317 = vand.u32 %v2316, 4294901760
      %v2318 = vsub.f32 %v2316, %v2317
      %v2319 = vand.u32 %v2318, 4294901760
      %2320 = vmatmul.f32.gmra.mxu0 %v2319
      %v2321 = vpop.f32.mrf.mxu0
      %v2322 = vadd.f32 0.0, %v2321
      %v2323 = vand.u32 %v2042, 4294901760
      %v2324 = vsub.f32 %v2042, %v2323
      %v2325 = vand.u32 %v2324, 4294901760
      %v2326 = vsub.f32 %v2324, %v2325
      %v2327 = vand.u32 %v2326, 4294901760
      %2328 = vmatmul.f32.gmra.mxu0 %v2327
      %v2329 = vpop.f32.mrf.mxu0
      %v2330 = vadd.f32 0.0, %v2329
      %v2331 = vand.u32 %v2045, 4294901760
      %v2332 = vsub.f32 %v2045, %v2331
      %v2333 = vand.u32 %v2332, 4294901760
      %v2334 = vsub.f32 %v2332, %v2333
      %v2335 = vand.u32 %v2334, 4294901760
      %2336 = vmatmul.f32.gmra.mxu0 %v2335
      %v2337 = vpop.f32.mrf.mxu0
      %v2338 = vadd.f32 0.0, %v2337
      %2339 = vdwg.mxu0
      %2340 = vmatpush.msra.mxu0 0.0
      %2341 = vmatpush.msra.mxu0 0.0
      %2342 = vmatpush.msra.mxu0 0.0
      %2343 = vmatpush.msra.mxu0 0.0
      %2344 = vmatpush.msra.mxu0 0.0
      %2345 = vmatpush.msra.mxu0 0.0
      %2346 = vmatpush.msra.mxu0 0.0
      %2347 = vmatpush.msra.mxu0 0.0
      %2348 = vmatpush.msra.mxu0 0.0
      %2349 = vmatpush.msra.mxu0 0.0
      %2350 = vmatpush.msra.mxu0 0.0
      %2351 = vmatpush.msra.mxu0 0.0
      %2352 = vmatpush.msra.mxu0 0.0
      %2353 = vmatpush.msra.mxu0 0.0
      %2354 = vmatpush.msra.mxu0 0.0
      %v2355 = vand.u32 %v2049, 4294901760
      %v2356 = vsub.f32 %v2049, %v2355
      %v2357 = vand.u32 %v2356, 4294901760
      %v2358 = vsub.f32 %v2356, %v2357
      %v2359 = vand.u32 %v2358, 4294901760
      %2360 = vmatpush.msra.mxu0 %v2359
      %v2361 = vand.u32 %v2036, 4294901760
      %2362 = vmatmul.f32.gmra.mxu0 %v2361
      %v2363 = vpop.f32.mrf.mxu0
      %v2364 = vadd.f32 %v2314, %v2363
      %v2365 = vand.u32 %v2039, 4294901760
      %2366 = vmatmul.f32.gmra.mxu0 %v2365
      %v2367 = vpop.f32.mrf.mxu0
      %v2368 = vadd.f32 %v2322, %v2367
      %v2369 = vand.u32 %v2042, 4294901760
      %2370 = vmatmul.f32.gmra.mxu0 %v2369
      %v2371 = vpop.f32.mrf.mxu0
      %v2372 = vadd.f32 %v2330, %v2371
      %v2373 = vand.u32 %v2045, 4294901760
      %2374 = vmatmul.f32.gmra.mxu0 %v2373
      %v2375 = vpop.f32.mrf.mxu0
      %v2376 = vadd.f32 %v2338, %v2375
      %2377 = vdwg.mxu0
      %2378 = vmatpush.msra.mxu0 0.0
      %2379 = vmatpush.msra.mxu0 0.0
      %2380 = vmatpush.msra.mxu0 0.0
      %2381 = vmatpush.msra.mxu0 0.0
      %2382 = vmatpush.msra.mxu0 0.0
      %2383 = vmatpush.msra.mxu0 0.0
      %2384 = vmatpush.msra.mxu0 0.0
      %2385 = vmatpush.msra.mxu0 0.0
      %2386 = vmatpush.msra.mxu0 0.0
      %2387 = vmatpush.msra.mxu0 0.0
      %2388 = vmatpush.msra.mxu0 0.0
      %2389 = vmatpush.msra.mxu0 0.0
      %2390 = vmatpush.msra.mxu0 0.0
      %2391 = vmatpush.msra.mxu0 0.0
      %2392 = vmatpush.msra.mxu0 0.0
      %v2393 = vand.u32 %v2049, 4294901760
      %v2394 = vsub.f32 %v2049, %v2393
      %2395 = vmatpush.msra.mxu0 %v2394
      %v2396 = vand.u32 %v2036, 4294901760
      %v2397 = vsub.f32 %v2036, %v2396
      %2398 = vmatmul.f32.gmra.mxu0 %v2397
      %v2399 = vpop.f32.mrf.mxu0
      %v2400 = vadd.f32 %v2364, %v2399
      %v2401 = vand.u32 %v2039, 4294901760
      %v2402 = vsub.f32 %v2039, %v2401
      %2403 = vmatmul.f32.gmra.mxu0 %v2402
      %v2404 = vpop.f32.mrf.mxu0
      %v2405 = vadd.f32 %v2368, %v2404
      %v2406 = vand.u32 %v2042, 4294901760
      %v2407 = vsub.f32 %v2042, %v2406
      %2408 = vmatmul.f32.gmra.mxu0 %v2407
      %v2409 = vpop.f32.mrf.mxu0
      %v2410 = vadd.f32 %v2372, %v2409
      %v2411 = vand.u32 %v2045, 4294901760
      %v2412 = vsub.f32 %v2045, %v2411
      %2413 = vmatmul.f32.gmra.mxu0 %v2412
      %v2414 = vpop.f32.mrf.mxu0
      %v2415 = vadd.f32 %v2376, %v2414
      %2416 = vdwg.mxu0
      %2417 = vmatpush.msra.mxu0 0.0
      %2418 = vmatpush.msra.mxu0 0.0
      %2419 = vmatpush.msra.mxu0 0.0
      %2420 = vmatpush.msra.mxu0 0.0
      %2421 = vmatpush.msra.mxu0 0.0
      %2422 = vmatpush.msra.mxu0 0.0
      %2423 = vmatpush.msra.mxu0 0.0
      %2424 = vmatpush.msra.mxu0 0.0
      %2425 = vmatpush.msra.mxu0 0.0
      %2426 = vmatpush.msra.mxu0 0.0
      %2427 = vmatpush.msra.mxu0 0.0
      %2428 = vmatpush.msra.mxu0 0.0
      %2429 = vmatpush.msra.mxu0 0.0
      %2430 = vmatpush.msra.mxu0 0.0
      %2431 = vmatpush.msra.mxu0 0.0
      %v2432 = vand.u32 %v2049, 4294901760
      %2433 = vmatpush.msra.mxu0 %v2432
      %v2434 = vand.u32 %v2036, 4294901760
      %v2435 = vsub.f32 %v2036, %v2434
      %v2436 = vand.u32 %v2435, 4294901760
      %2437 = vmatmul.f32.gmra.mxu0 %v2436
      %v2438 = vpop.f32.mrf.mxu0
      %v2439 = vadd.f32 %v2400, %v2438
      %v2440 = vand.u32 %v2039, 4294901760
      %v2441 = vsub.f32 %v2039, %v2440
      %v2442 = vand.u32 %v2441, 4294901760
      %2443 = vmatmul.f32.gmra.mxu0 %v2442
      %v2444 = vpop.f32.mrf.mxu0
      %v2445 = vadd.f32 %v2405, %v2444
      %v2446 = vand.u32 %v2042, 4294901760
      %v2447 = vsub.f32 %v2042, %v2446
      %v2448 = vand.u32 %v2447, 4294901760
      %2449 = vmatmul.f32.gmra.mxu0 %v2448
      %v2450 = vpop.f32.mrf.mxu0
      %v2451 = vadd.f32 %v2410, %v2450
      %v2452 = vand.u32 %v2045, 4294901760
      %v2453 = vsub.f32 %v2045, %v2452
      %v2454 = vand.u32 %v2453, 4294901760
      %2455 = vmatmul.f32.gmra.mxu0 %v2454
      %v2456 = vpop.f32.mrf.mxu0
      %v2457 = vadd.f32 %v2415, %v2456
      %2458 = vdwg.mxu0
      %2459 = vmatpush.msra.mxu0 0.0
      %2460 = vmatpush.msra.mxu0 0.0
      %2461 = vmatpush.msra.mxu0 0.0
      %2462 = vmatpush.msra.mxu0 0.0
      %2463 = vmatpush.msra.mxu0 0.0
      %2464 = vmatpush.msra.mxu0 0.0
      %2465 = vmatpush.msra.mxu0 0.0
      %2466 = vmatpush.msra.mxu0 0.0
      %2467 = vmatpush.msra.mxu0 0.0
      %2468 = vmatpush.msra.mxu0 0.0
      %2469 = vmatpush.msra.mxu0 0.0
      %2470 = vmatpush.msra.mxu0 0.0
      %2471 = vmatpush.msra.mxu0 0.0
      %2472 = vmatpush.msra.mxu0 0.0
      %2473 = vmatpush.msra.mxu0 0.0
      %v2474 = vand.u32 %v2049, 4294901760
      %v2475 = vsub.f32 %v2049, %v2474
      %v2476 = vand.u32 %v2475, 4294901760
      %2477 = vmatpush.msra.mxu0 %v2476
      %v2478 = vand.u32 %v2036, 4294901760
      %2479 = vmatmul.f32.gmra.mxu0 %v2478
      %v2480 = vpop.f32.mrf.mxu0
      %v2481 = vadd.f32 %v2439, %v2480
      %v2482 = vand.u32 %v2039, 4294901760
      %2483 = vmatmul.f32.gmra.mxu0 %v2482
      %v2484 = vpop.f32.mrf.mxu0
      %v2485 = vadd.f32 %v2445, %v2484
      %v2486 = vand.u32 %v2042, 4294901760
      %2487 = vmatmul.f32.gmra.mxu0 %v2486
      %v2488 = vpop.f32.mrf.mxu0
      %v2489 = vadd.f32 %v2451, %v2488
      %v2490 = vand.u32 %v2045, 4294901760
      %2491 = vmatmul.f32.gmra.mxu0 %v2490
      %v2492 = vpop.f32.mrf.mxu0
      %v2493 = vadd.f32 %v2457, %v2492
      %2494 = vdwg.mxu0
      %2495 = vmatpush.msra.mxu0 0.0
      %2496 = vmatpush.msra.mxu0 0.0
      %2497 = vmatpush.msra.mxu0 0.0
      %2498 = vmatpush.msra.mxu0 0.0
      %2499 = vmatpush.msra.mxu0 0.0
      %2500 = vmatpush.msra.mxu0 0.0
      %2501 = vmatpush.msra.mxu0 0.0
      %2502 = vmatpush.msra.mxu0 0.0
      %2503 = vmatpush.msra.mxu0 0.0
      %2504 = vmatpush.msra.mxu0 0.0
      %2505 = vmatpush.msra.mxu0 0.0
      %2506 = vmatpush.msra.mxu0 0.0
      %2507 = vmatpush.msra.mxu0 0.0
      %2508 = vmatpush.msra.mxu0 0.0
      %2509 = vmatpush.msra.mxu0 0.0
      %v2510 = vand.u32 %v2049, 4294901760
      %2511 = vmatpush.msra.mxu0 %v2510
      %v2512 = vand.u32 %v2036, 4294901760
      %2513 = vmatmul.f32.gmra.mxu0 %v2512
      %v2514 = vpop.f32.mrf.mxu0
      %v2515 = vadd.f32 %v2481, %v2514
      %v2516 = vand.u32 %v2039, 4294901760
      %2517 = vmatmul.f32.gmra.mxu0 %v2516
      %v2518 = vpop.f32.mrf.mxu0
      %v2519 = vadd.f32 %v2485, %v2518
      %v2520 = vand.u32 %v2042, 4294901760
      %2521 = vmatmul.f32.gmra.mxu0 %v2520
      %v2522 = vpop.f32.mrf.mxu0
      %v2523 = vadd.f32 %v2489, %v2522
      %v2524 = vand.u32 %v2045, 4294901760
      %2525 = vmatmul.f32.gmra.mxu0 %v2524
      %v2526 = vpop.f32.mrf.mxu0
      %v2527 = vadd.f32 %v2493, %v2526
      %2528 = vdwg.mxu0
      %v2529 = vadd.f32 %v2018, %v2276
      %v2530 = vadd.f32 %v2019, %v2515
      %v2531 = vadd.f32 %v2020, %v2280
      %v2532 = vadd.f32 %v2021, %v2519
      %v2533 = vadd.f32 %v2022, %v2284
      %v2534 = vadd.f32 %v2023, %v2523
      %v2535 = vadd.f32 %v2024, %v2288
      %v2536 = vadd.f32 %v2025, %v2527
      %v2537 = vld [vmem:[%s8] sm:$0xff]
      %v2538 = vld [vmem:[%s8 + $0x8] sm:$0xff]
      %v2539 = vld [vmem:[%s8 + $0x10] sm:$0xff]
      %v2540 = vld [vmem:[%s8 + $0x18] sm:$0xff]
      %2542 = vset.pattern.permute.xlu0 0
      %2543 = vperm.xlu0 %2542, %v2537
      %v2544 = vpop.permute.xlu0 %2543
      %2547 = vset.pattern.permute.xlu0 0
      %2548 = vperm.xlu0 %2547, %v2538
      %v2549 = vpop.permute.xlu0 %2548
      %2552 = vset.pattern.permute.xlu0 0
      %2553 = vperm.xlu0 %2552, %v2539
      %v2554 = vpop.permute.xlu0 %2553
      %2557 = vset.pattern.permute.xlu0 0
      %2558 = vperm.xlu0 %2557, %v2540
      %v2559 = vpop.permute.xlu0 %2558
      %v2561 = vmul.f32 %v2529, %v2544
      %v2562 = vmul.f32 %v2530, %v2544
      %v2563 = vmul.f32 %v2531, %v2549
      %v2564 = vmul.f32 %v2532, %v2549
      %v2565 = vmul.f32 %v2533, %v2554
      %v2566 = vmul.f32 %v2534, %v2554
      %v2567 = vmul.f32 %v2535, %v2559
      %v2568 = vmul.f32 %v2536, %v2559
      %v2569 = vld [vmem:[%s9] sm:$0xff]
      %v2570 = vld [vmem:[%s9 + $0x8] sm:$0xff]
      %v2571 = vld [vmem:[%s9 + $0x10] sm:$0xff]
      %v2572 = vld [vmem:[%s9 + $0x18] sm:$0xff]
      %2574 = vset.pattern.permute.xlu0 0
      %2575 = vperm.xlu0 %2574, %v2569
      %v2576 = vpop.permute.xlu0 %2575
      %2579 = vset.pattern.permute.xlu0 0
      %2580 = vperm.xlu0 %2579, %v2570
      %v2581 = vpop.permute.xlu0 %2580
      %2584 = vset.pattern.permute.xlu0 0
      %2585 = vperm.xlu0 %2584, %v2571
      %v2586 = vpop.permute.xlu0 %2585
      %2589 = vset.pattern.permute.xlu0 0
      %2590 = vperm.xlu0 %2589, %v2572
      %v2591 = vpop.permute.xlu0 %2590
      %v2593 = vadd.f32 %v2561, %v2576
      %v2594 = vadd.f32 %v2562, %v2576
      %v2595 = vadd.f32 %v2563, %v2581
      %v2596 = vadd.f32 %v2564, %v2581
      %v2597 = vadd.f32 %v2565, %v2586
      %v2598 = vadd.f32 %v2566, %v2586
      %v2599 = vadd.f32 %v2567, %v2591
      %v2600 = vadd.f32 %v2568, %v2591
      %v2601 = vsub.f32 0.0, %v2593
      %v2602 = vsub.f32 0.0, %v2594
      %v2603 = vsub.f32 0.0, %v2595
      %v2604 = vsub.f32 0.0, %v2596
      %v2605 = vsub.f32 0.0, %v2597
      %v2606 = vsub.f32 0.0, %v2598
      %v2607 = vsub.f32 0.0, %v2599
      %v2608 = vsub.f32 0.0, %v2600
      %v2609 = vmul.f32 %v2601, 1.442695
      %v2610 = vpow.pop %v2609
      %v2611 = vmul.f32 %v2602, 1.442695
      %v2612 = vpow.pop %v2611
      %v2613 = vmul.f32 %v2603, 1.442695
      %v2614 = vpow.pop %v2613
      %v2615 = vmul.f32 %v2604, 1.442695
      %v2616 = vpow.pop %v2615
      %v2617 = vmul.f32 %v2605, 1.442695
      %v2618 = vpow.pop %v2617
      %v2619 = vmul.f32 %v2606, 1.442695
      %v2620 = vpow.pop %v2619
      %v2621 = vmul.f32 %v2607, 1.442695
      %v2622 = vpow.pop %v2621
      %v2623 = vmul.f32 %v2608, 1.442695
      %v2624 = vpow.pop %v2623
      %v2625 = vadd.f32 %v2610, 1.0
      %v2626 = vadd.f32 %v2612, 1.0
      %v2627 = vadd.f32 %v2614, 1.0
      %v2628 = vadd.f32 %v2616, 1.0
      %v2629 = vadd.f32 %v2618, 1.0
      %v2630 = vadd.f32 %v2620, 1.0
      %v2631 = vadd.f32 %v2622, 1.0
      %v2632 = vadd.f32 %v2624, 1.0
      %v2633 = vrcp.pop %v2625
      %v2634 = vmul.f32 %v2625, %v2633
      %v2635 = vsub.f32 1.0, %v2634
      %v2636 = vmul.f32 %v2633, %v2635
      %v2637 = vadd.f32 %v2633, %v2636
      %vm2638 = vweird.f32 %v2625
      %vm2639 = vweird.f32 %v2633
      %vm2640 = vmor %vm2638, %vm2639
      %v2641 = vsel %vm2640, %v2633, %v2637
      %v2642 = vand.u32 2147483647, %v2625
      %vm2643 = vcmp.eq.f32.partialorder %v2642, 8.507059e+37
      %v2644 = vand.u32 %v2625, 2147483648
      %v2645 = vor.u32 1.1754944e-38, %v2644
      %v2646 = vsel %vm2643, %v2645, %v2641
      %v2647 = vmul.f32 1.0, %v2646
      %v2648 = vrcp.pop %v2626
      %v2649 = vmul.f32 %v2626, %v2648
      %v2650 = vsub.f32 1.0, %v2649
      %v2651 = vmul.f32 %v2648, %v2650
      %v2652 = vadd.f32 %v2648, %v2651
      %vm2653 = vweird.f32 %v2626
      %vm2654 = vweird.f32 %v2648
      %vm2655 = vmor %vm2653, %vm2654
      %v2656 = vsel %vm2655, %v2648, %v2652
      %v2657 = vand.u32 2147483647, %v2626
      %vm2658 = vcmp.eq.f32.partialorder %v2657, 8.507059e+37
      %v2659 = vand.u32 %v2626, 2147483648
      %v2660 = vor.u32 1.1754944e-38, %v2659
      %v2661 = vsel %vm2658, %v2660, %v2656
      %v2662 = vmul.f32 1.0, %v2661
      %v2663 = vrcp.pop %v2627
      %v2664 = vmul.f32 %v2627, %v2663
      %v2665 = vsub.f32 1.0, %v2664
      %v2666 = vmul.f32 %v2663, %v2665
      %v2667 = vadd.f32 %v2663, %v2666
      %vm2668 = vweird.f32 %v2627
      %vm2669 = vweird.f32 %v2663
      %vm2670 = vmor %vm2668, %vm2669
      %v2671 = vsel %vm2670, %v2663, %v2667
      %v2672 = vand.u32 2147483647, %v2627
      %vm2673 = vcmp.eq.f32.partialorder %v2672, 8.507059e+37
      %v2674 = vand.u32 %v2627, 2147483648
      %v2675 = vor.u32 1.1754944e-38, %v2674
      %v2676 = vsel %vm2673, %v2675, %v2671
      %v2677 = vmul.f32 1.0, %v2676
      %v2678 = vrcp.pop %v2628
      %v2679 = vmul.f32 %v2628, %v2678
      %v2680 = vsub.f32 1.0, %v2679
      %v2681 = vmul.f32 %v2678, %v2680
      %v2682 = vadd.f32 %v2678, %v2681
      %vm2683 = vweird.f32 %v2628
      %vm2684 = vweird.f32 %v2678
      %vm2685 = vmor %vm2683, %vm2684
      %v2686 = vsel %vm2685, %v2678, %v2682
      %v2687 = vand.u32 2147483647, %v2628
      %vm2688 = vcmp.eq.f32.partialorder %v2687, 8.507059e+37
      %v2689 = vand.u32 %v2628, 2147483648
      %v2690 = vor.u32 1.1754944e-38, %v2689
      %v2691 = vsel %vm2688, %v2690, %v2686
      %v2692 = vmul.f32 1.0, %v2691
      %v2693 = vrcp.pop %v2629
      %v2694 = vmul.f32 %v2629, %v2693
      %v2695 = vsub.f32 1.0, %v2694
      %v2696 = vmul.f32 %v2693, %v2695
      %v2697 = vadd.f32 %v2693, %v2696
      %vm2698 = vweird.f32 %v2629
      %vm2699 = vweird.f32 %v2693
      %vm2700 = vmor %vm2698, %vm2699
      %v2701 = vsel %vm2700, %v2693, %v2697
      %v2702 = vand.u32 2147483647, %v2629
      %vm2703 = vcmp.eq.f32.partialorder %v2702, 8.507059e+37
      %v2704 = vand.u32 %v2629, 2147483648
      %v2705 = vor.u32 1.1754944e-38, %v2704
      %v2706 = vsel %vm2703, %v2705, %v2701
      %v2707 = vmul.f32 1.0, %v2706
      %v2708 = vrcp.pop %v2630
      %v2709 = vmul.f32 %v2630, %v2708
      %v2710 = vsub.f32 1.0, %v2709
      %v2711 = vmul.f32 %v2708, %v2710
      %v2712 = vadd.f32 %v2708, %v2711
      %vm2713 = vweird.f32 %v2630
      %vm2714 = vweird.f32 %v2708
      %vm2715 = vmor %vm2713, %vm2714
      %v2716 = vsel %vm2715, %v2708, %v2712
      %v2717 = vand.u32 2147483647, %v2630
      %vm2718 = vcmp.eq.f32.partialorder %v2717, 8.507059e+37
      %v2719 = vand.u32 %v2630, 2147483648
      %v2720 = vor.u32 1.1754944e-38, %v2719
      %v2721 = vsel %vm2718, %v2720, %v2716
      %v2722 = vmul.f32 1.0, %v2721
      %v2723 = vrcp.pop %v2631
      %v2724 = vmul.f32 %v2631, %v2723
      %v2725 = vsub.f32 1.0, %v2724
      %v2726 = vmul.f32 %v2723, %v2725
      %v2727 = vadd.f32 %v2723, %v2726
      %vm2728 = vweird.f32 %v2631
      %vm2729 = vweird.f32 %v2723
      %vm2730 = vmor %vm2728, %vm2729
      %v2731 = vsel %vm2730, %v2723, %v2727
      %v2732 = vand.u32 2147483647, %v2631
      %vm2733 = vcmp.eq.f32.partialorder %v2732, 8.507059e+37
      %v2734 = vand.u32 %v2631, 2147483648
      %v2735 = vor.u32 1.1754944e-38, %v2734
      %v2736 = vsel %vm2733, %v2735, %v2731
      %v2737 = vmul.f32 1.0, %v2736
      %v2738 = vrcp.pop %v2632
      %v2739 = vmul.f32 %v2632, %v2738
      %v2740 = vsub.f32 1.0, %v2739
      %v2741 = vmul.f32 %v2738, %v2740
      %v2742 = vadd.f32 %v2738, %v2741
      %vm2743 = vweird.f32 %v2632
      %vm2744 = vweird.f32 %v2738
      %vm2745 = vmor %vm2743, %vm2744
      %v2746 = vsel %vm2745, %v2738, %v2742
      %v2747 = vand.u32 2147483647, %v2632
      %vm2748 = vcmp.eq.f32.partialorder %v2747, 8.507059e+37
      %v2749 = vand.u32 %v2632, 2147483648
      %v2750 = vor.u32 1.1754944e-38, %v2749
      %v2751 = vsel %vm2748, %v2750, %v2746
      %v2752 = vmul.f32 1.0, %v2751
      %v2753 = vmul.f32 %v2593, %v2647
      %v2754 = vmul.f32 %v2594, %v2662
      %v2755 = vmul.f32 %v2595, %v2677
      %v2756 = vmul.f32 %v2596, %v2692
      %v2757 = vmul.f32 %v2597, %v2707
      %v2758 = vmul.f32 %v2598, %v2722
      %v2759 = vmul.f32 %v2599, %v2737
      %v2760 = vmul.f32 %v2600, %v2752
      %2761 = vst [vmem:[%s505] sm:$0xff] %v2753
      %2762 = vst [vmem:[%s505 + $0x8] sm:$0xff] %v2754
      %2763 = vst [vmem:[%s505 + $0x10] sm:$0xff] %v2755
      %2764 = vst [vmem:[%s505 + $0x18] sm:$0xff] %v2756
      %2765 = vst [vmem:[%s505 + $0x20] sm:$0xff] %v2757
      %2766 = vst [vmem:[%s505 + $0x28] sm:$0xff] %v2758
      %2767 = vst [vmem:[%s505 + $0x30] sm:$0xff] %v2759
      %2768 = vst [vmem:[%s505 + $0x38] sm:$0xff] %v2760
      %s2769 = smul.u32 2, %s26
      %p2770 = scmp.lt.s32.totalorder %s25, 1
      %s2771 = scalar_select %p2770, %s25, 1
      %p2772 = scmp.lt.s32.totalorder %s2769, 1
      %s2773 = scalar_select %p2772, %s2769, 1
      %s2774 = smul.addr %s2771, 8
      %s2775 = sadd.s32 %s2773, %s2774
      %s2776 = smul.addr %s2775, 8
      %s2777 = scalar_lea.vmem %s10, %s2776
      // Predicated region
      $region61: #{rfb1_forward.1} parent=59 // pred_check
        %p2778 = pneg %p291
      $region62: #{rfb1_forward.1} parent=59 // pred_check_branch
        %2780 = sbr.rel (%p2778) target = $region64
      $region63: #{rfb1_forward.1} parent=59 // pred_region
        %s2781 = smul.u32 2, %s26
      $region64: #{rfb1_forward.1} parent=59 // pred_fallthru
        _
    $region60: #{rfb1_forward.1} parent=5 // pred_fallthru
      _
    %p2782 = scmp.le.s32.totalorder 2, %s16
    // Predicated region
    $region65: #{rfb1_forward.1} parent=5 // pred_check
      %p2783 = pneg %p2782
    $region66: #{rfb1_forward.1} parent=5 // pred_check_branch
      %2785 = sbr.rel (%p2783) target = $region68
    $region67: #{rfb1_forward.1} parent=5 // pred_region
      %s2786 = ssub.s32 %s16, 2
      // Predicated region
      $region69: #{rfb1_forward.1} parent=67 // pred_check
        %p2787 = pneg %p297
      $region70: #{rfb1_forward.1} parent=67 // pred_check_branch
        %2789 = sbr.rel (%p2787) target = $region72
      $region71: #{rfb1_forward.1} parent=67 // pred_region
        %s2790 = smul.u32 2, %s28
        %p2791 = scmp.lt.s32.totalorder %s27, 1
        %s2792 = scalar_select %p2791, %s27, 1
        %p2793 = scmp.lt.s32.totalorder %s2790, 1
        %s2794 = scalar_select %p2793, %s2790, 1
        %s2795 = smul.addr %s2792, 8
        %s2796 = sadd.s32 %s2794, %s2795
        %s2797 = smul.addr %s2796, 8
        %s2798 = scalar_lea.vmem %s10, %s2797
      $region72: #{rfb1_forward.1} parent=67 // pred_fallthru
        _
    $region68: #{rfb1_forward.1} parent=5 // pred_fallthru
      _
  $region6: #{rfb1_forward.1} parent=0 // loop_footer
    %s20 = sadd.s32 1, %s16
  $region7: #{rfb1_forward.1} parent=0 // loop_footer_branch
    %15 = sbr.rel target = $region3
  $region8: #{rfb1_forward.1} parent=0 // loop_exit
    _

</llo_original>
